<compile_context>
chip_gen: v7x
topology: tpu7x:2x2x1
jax: 0.10.0
libtpu: 0.0.40
codegen_flags: <defaults>
</compile_context>

<pallas_src>
import functools

import jax
import jax.numpy as jnp
from jax import lax
from jax.experimental import pallas as pl
from jax.experimental.pallas import tpu as pltpu

EPS = 1e-5  # nn.InstanceNorm2d default (affine=False)


def _round_up(x, m):
    return (x + m - 1) // m * m


# ----------------------------- in-kernel helpers --------------------------- #

def _instnorm(y, inv_hw):
    # y: (C, HW) f32. Two-pass mean/variance over the spatial (lane) axis per channel row.
    mean = jnp.sum(y, axis=1, keepdims=True) * inv_hw
    d = y - mean
    var = jnp.sum(d * d, axis=1, keepdims=True) * inv_hw
    return d * lax.rsqrt(var + EPS)


# ----------------------------- fused Pallas kernel ------------------------- #

def _bottleneck_kernel(*refs, H, W, b_tile, has_shortcut, mm_dtype):
    if has_shortcut:
        x_ref, w1_ref, w2_ref, w3_ref, ws_ref, o_ref = refs
    else:
        x_ref, w1_ref, w2_ref, w3_ref, o_ref = refs
        ws_ref = None

    HW = H * W
    inv_hw = 1.0 / float(HW)
    mid_p = w2_ref.shape[1]

    # ---- hoisted, tap-loop-invariant boundary masks (function of lane index only) ----
    j = lax.broadcasted_iota(jnp.int32, (1, HW), 1)
    col = j % W
    not_left = col >= 1            # tap reads from w-1 (ow == -1)
    not_right = col <= W - 2       # ow == +1
    not_top = j >= W               # oh == -1
    not_bot = j < HW - W           # oh == +1

    # Per-tap (flat shift, combined mask, weight tile) -- hoisted out of the batch loop.
    taps = []
    for dh in range(3):
        for dw in range(3):
            oh, ow = dh - 1, dw - 1
            d = oh * W + ow
            mask = None
            if oh == -1:
                mask = not_top
            elif oh == 1:
                mask = not_bot
            if ow == -1:
                mask = not_left if mask is None else jnp.logical_and(mask, not_left)
            elif ow == 1:
                mask = not_right if mask is None else jnp.logical_and(mask, not_right)
            taps.append((d, mask, w2_ref[dh * 3 + dw]))   # (mid_p, mid_p), already mm_dtype

    w1 = w1_ref[...]                                   # (mid_p, Cin_k)  mm_dtype
    w3 = w3_ref[...]                                   # (Cout_p, mid_p) mm_dtype
    ws = ws_ref[...] if has_shortcut else None         # (Cout_p, Cin_k) mm_dtype

    for b in range(b_tile):
        x = x_ref[b]                                   # (Cin_k, HW) f32
        xm = x.astype(mm_dtype)

        # --- stage 1: 1x1 conv + IN + ReLU (bias cancels under affine-free IN) ---
        y1 = jnp.dot(w1, xm, preferred_element_type=jnp.float32)
        y1 = jnp.maximum(_instnorm(y1, inv_hw), 0.0)   # (mid_p, HW)

        # --- stage 2: 3x3 conv (padding=1): 9 lane rolls + edge masks, f32 accumulate ---
        y2 = jnp.zeros((mid_p, HW), jnp.float32)
        for d, mask, w2_tap in taps:
            shifted = y1 if d == 0 else pltpu.roll(y1, shift=(-d) % HW, axis=1)
            if mask is not None:
                shifted = jnp.where(mask, shifted, 0.0)
            y2 = y2 + jnp.dot(w2_tap, shifted.astype(mm_dtype),
                              preferred_element_type=jnp.float32)
        y2 = jnp.maximum(_instnorm(y2, inv_hw), 0.0)

        # --- stage 3: 1x1 conv + IN + ReLU ---
        y3 = jnp.dot(w3, y2.astype(mm_dtype), preferred_element_type=jnp.float32)
        y3 = jnp.maximum(_instnorm(y3, inv_hw), 0.0)   # (Cout_p, HW)

        # --- shortcut branch + residual add, fused ---
        if has_shortcut:
            r = _instnorm(jnp.dot(ws, xm, preferred_element_type=jnp.float32), inv_hw)
        else:
            r = x                                      # identity (Cin_k == Cout_p via wrapper pad)
        o_ref[b] = (y3 + r).astype(o_ref.dtype)


# ----------------------------- wrapper -------------------------------------- #

def _pick_b_tile(n):
    # Biggest batch tile that still leaves >= 2 grid steps (keeps both v7x TCs busy).
    for b in (8, 4, 2):
        if n % b == 0 and n // b >= 2:
            return b
    return 1


def bottleneck_forward(x_nchw, params, *, matmul_dtype=jnp.bfloat16, b_tile=None):
    N, Cin, H, W = x_nchw.shape
    HW = H * W
    mid = params["w1"].shape[1]
    Cout = params["w3"].shape[1]
    has_shortcut = "ws" in params

    # Sublane-aligned channel counts (f32 sublane = 8): full (8,128) tiles, unmasked stores.
    mid_p = _round_up(mid, 8)
    Cout_p = _round_up(Cout, 8)

    if b_tile is None:
        b_tile = _pick_b_tile(N)
    assert N % b_tile == 0, (N, b_tile)

    # (C, HW) layout is NCHW-native: pure reshape, no transpose / relayout.
    x_flat = x_nchw.reshape(N, Cin, HW).astype(jnp.float32)
    if not has_shortcut and Cout_p != Cin:
        # Identity residual: pad channel dim so the in-kernel add lines up with o_ref.
        x_flat = jnp.pad(x_flat, ((0, 0), (0, Cout_p - Cin), (0, 0)))
    Cin_k = x_flat.shape[1]

    # Zero-padded, pre-transposed weights, cast once in the wrapper (f32 accumulate in-kernel).
    w1p = jnp.zeros((mid_p, Cin_k), jnp.float32).at[:mid, :Cin].set(
        params["w1"].T).astype(matmul_dtype)
    # conv2 HWIO (kh,kw,ci,co) -> (tap, co, ci), zero-padded to (9, mid_p, mid_p).
    w2p = jnp.zeros((9, mid_p, mid_p), jnp.float32).at[:, :mid, :mid].set(
        jnp.transpose(params["w2"].reshape(9, mid, mid), (0, 2, 1))).astype(matmul_dtype)
    w3p = jnp.zeros((Cout_p, mid_p), jnp.float32).at[:Cout, :mid].set(
        params["w3"].T).astype(matmul_dtype)

    inputs = [x_flat, w1p, w2p, w3p]
    in_specs = [
        pl.BlockSpec((b_tile, Cin_k, HW), lambda n: (n, 0, 0)),
        pl.BlockSpec((mid_p, Cin_k), lambda n: (0, 0)),
        pl.BlockSpec((9, mid_p, mid_p), lambda n: (0, 0, 0)),
        pl.BlockSpec((Cout_p, mid_p), lambda n: (0, 0)),
    ]
    if has_shortcut:
        wsp = jnp.zeros((Cout_p, Cin_k), jnp.float32).at[:Cout, :Cin].set(
            params["ws"].T).astype(matmul_dtype)
        inputs.append(wsp)
        in_specs.append(pl.BlockSpec((Cout_p, Cin_k), lambda n: (0, 0)))

    # Explicit VMEM budget (double-buffered blocks + weights + live intermediates), with headroom.
    est_bytes = 4 * (
        2 * b_tile * (Cin_k + Cout_p) * HW
        + 2 * (mid_p * Cin_k + 9 * mid_p * mid_p + Cout_p * mid_p + Cout_p * Cin_k)
        + 12 * max(mid_p, Cout_p, Cin_k) * HW)
    vmem_limit = int(min(max(2 * est_bytes, 32 * 1024 * 1024), 48 * 1024 * 1024))

    out = pl.pallas_call(
        functools.partial(_bottleneck_kernel, H=H, W=W, b_tile=b_tile,
                          has_shortcut=has_shortcut, mm_dtype=matmul_dtype),
        out_shape=jax.ShapeDtypeStruct((N, Cout_p, HW), jnp.float32),
        grid_spec=pltpu.PrefetchScalarGridSpec(
            num_scalar_prefetch=0,
            grid=(N // b_tile,),
            in_specs=in_specs,
            out_specs=pl.BlockSpec((b_tile, Cout_p, HW), lambda n: (n, 0, 0)),
        ),
        compiler_params=pltpu.CompilerParams(
            dimension_semantics=("parallel",),
            vmem_limit_bytes=vmem_limit,
        ),
    )(*inputs)

    return out[:, :Cout, :].reshape(N, Cout, H, W)


# ----------------------------- params / reference -------------------------- #

def init_params(key, in_channels, out_channels, kernel_size=3):
    mid = out_channels // 4
    ks = jax.random.split(key, 8)

    def u(k, shape, fan_in):
        bound = 1.0 / jnp.sqrt(jnp.float32(fan_in))
        return jax.random.uniform(k, shape, jnp.float32, -bound, bound)

    params = dict(
        w1=u(ks[0], (in_channels, mid), in_channels),                   # conv1 1x1 (Cin, mid)
        b1=u(ks[1], (1, mid), in_channels),                             # dead under affine=False IN
        w2=u(ks[2], (kernel_size, kernel_size, mid, mid),
             mid * kernel_size * kernel_size),                          # conv2 3x3 HWIO
        b2=u(ks[3], (1, mid), mid * kernel_size * kernel_size),
        w3=u(ks[4], (mid, out_channels), mid),                          # conv3 1x1
        b3=u(ks[5], (1, out_channels), mid),
    )
    if in_channels != out_channels:
        params["ws"] = u(ks[6], (in_channels, out_channels), in_channels)   # shortcut 1x1
        params["bs"] = u(ks[7], (1, out_channels), in_channels)
    return params


def _ref_forward(x, p):
    # Pure-JAX reference mirroring the torch module (biases included; they cancel
    # under affine=False InstanceNorm, so it matches the bias-free kernel).
    def conv1x1(x, w, b):
        return jnp.einsum("nchw,co->nohw", x, w) + b[0][None, :, None, None]

    def conv3x3(x, w, b):
        y = lax.conv_general_dilated(
            x, w, window_strides=(1, 1), padding="SAME",
            dimension_numbers=("NCHW", "HWIO", "NCHW"))
        return y + b[0][None, :, None, None]

    def inorm(x):
        mean = x.mean(axis=(2, 3), keepdims=True)
        var = ((x - mean) ** 2).mean(axis=(2, 3), keepdims=True)
        return (x - mean) / jnp.sqrt(var + EPS)

    h = jax.nn.relu(inorm(conv1x1(x, p["w1"], p["b1"])))
    h = jax.nn.relu(inorm(conv3x3(h, p["w2"], p["b2"])))
    h = jax.nn.relu(inorm(conv1x1(h, p["w3"], p["b3"])))
    residual = inorm(conv1x1(x, p["ws"], p["bs"])) if "ws" in p else x
    return h + residual


# ----------------------------- main ----------------------------------------- #

if __name__ == "__main__":
    key = jax.random.PRNGKey(0)
    kx1, kp1, kx2, kp2, kx3, kp3 = jax.random.split(key, 6)

    def check(name, x, params, dtype, atol, rtol):
        out = jax.block_until_ready(bottleneck_forward(x, params, matmul_dtype=dtype))
        ref = _ref_forward(x, params)
        if not jnp.allclose(out, ref, atol=atol, rtol=rtol):
            raise AssertionError(
                f"{name} mismatch: max abs err {float(jnp.max(jnp.abs(out - ref)))}")
        return out

    # Case 1: Cin != Cout -> fused 1x1 conv + IN shortcut branch (N=2 -> b_tile=1, grid=2).
    N, Cin, H, W = 2, 4, 16, 16
    Cout = 8
    x = jax.random.normal(kx1, (N, Cin, H, W), jnp.float32)
    p = init_params(kp1, Cin, Cout)
    out = check("shortcut/f32", x, p, jnp.float32, 2e-3, 2e-3)
    assert out.shape == (N, Cout, H, W), out.shape
    check("shortcut/bf16", x, p, jnp.bfloat16, 5e-2, 5e-2)

    # Case 2: Cin == Cout -> identity shortcut; N=4 -> b_tile=2, grid=2 (multi-sample per step).
    x2 = jax.random.normal(kx2, (4, Cout, H, W), jnp.float32)
    p2 = init_params(kp2, Cout, Cout)
    check("identity/f32", x2, p2, jnp.float32, 2e-3, 2e-3)
    check("identity/bf16", x2, p2, jnp.bfloat16, 5e-2, 5e-2)

    # Case 3: Cin == Cout == 4 (< sublane width 8) -> exercises the channel-padding path.
    x3 = jax.random.normal(kx3, (2, 4, H, W), jnp.float32)
    p3 = init_params(kp3, 4, 4)
    check("identity-padded/f32", x3, p3, jnp.float32, 2e-3, 2e-3)

    print("KERNEL_OK")
</pallas_src>

<mosaic_0001>
module attributes {stable_mosaic.version = 11 : i64} {
  func.func @_bottleneck_kernel(%arg0: i32, %arg1: memref<1x4x256xf32, #tpu.memory_space<vmem>>, %arg2: memref<8x4xf32, #tpu.memory_space<vmem>>, %arg3: memref<9x8x8xf32, #tpu.memory_space<vmem>>, %arg4: memref<8x8xf32, #tpu.memory_space<vmem>>, %arg5: memref<8x4xf32, #tpu.memory_space<vmem>>, %arg6: memref<1x8x256xf32, #tpu.memory_space<vmem>>) attributes {dimension_semantics = [#tpu.dimension_semantics<parallel>], iteration_bounds = array<i64: 2>, scalar_prefetch = 0 : i64, scratch_operands = 0 : i64, tpu.core_type = #tpu.core_type<tc>, window_params = [{transform_indices = @transform_0, window_bounds = array<i64: 1, 4, 256>}, {pipeline_mode = #tpu.pipeline_mode<synchronous>, transform_indices = @transform_1, window_bounds = array<i64: 8, 4>}, {pipeline_mode = #tpu.pipeline_mode<synchronous>, transform_indices = @transform_2, window_bounds = array<i64: 9, 8, 8>}, {pipeline_mode = #tpu.pipeline_mode<synchronous>, transform_indices = @transform_3, window_bounds = array<i64: 8, 8>}, {pipeline_mode = #tpu.pipeline_mode<synchronous>, transform_indices = @transform_4, window_bounds = array<i64: 8, 4>}, {transform_indices = @transform_5, window_bounds = array<i64: 1, 8, 256>}]} {
    %0 = tpu.iota {dimensions = array<i32: 1>} : vector<1x256xi32>
    %c16_i32 = arith.constant 16 : i32
    %c0_i32 = arith.constant 0 : i32
    %1 = arith.cmpi eq, %c16_i32, %c0_i32 : i32
    %c1_i32 = arith.constant 1 : i32
    %2 = arith.select %1, %c1_i32, %c16_i32 : i32
    %3 = vector.broadcast %2 : i32 to vector<1x256xi32>
    %4 = arith.remsi %0, %3 : vector<1x256xi32>
    %c0_i32_0 = arith.constant 0 : i32
    %5 = vector.broadcast %c0_i32_0 : i32 to vector<1x256xi32>
    %6 = arith.cmpi ne, %4, %5 : vector<1x256xi32>
    %c0_i32_1 = arith.constant 0 : i32
    %7 = vector.broadcast %c0_i32_1 : i32 to vector<1x256xi32>
    %8 = arith.cmpi slt, %4, %7 : vector<1x256xi32>
    %c0_i32_2 = arith.constant 0 : i32
    %9 = arith.cmpi slt, %2, %c0_i32_2 : i32
    %10 = vector.broadcast %9 : i1 to vector<1x256xi1>
    %11 = vector.broadcast %10 : vector<1x256xi1> to vector<1x256xi1>
    %12 = arith.xori %8, %11 : vector<1x256xi1>
    %13 = arith.andi %12, %6 : vector<1x256xi1>
    %14 = vector.broadcast %2 : i32 to vector<1x256xi32>
    %15 = arith.addi %4, %14 : vector<1x256xi32>
    %16 = arith.select %13, %15, %4 : vector<1x256xi1>, vector<1x256xi32>
    %c1_i32_3 = arith.constant 1 : i32
    %17 = vector.broadcast %c1_i32_3 : i32 to vector<1x256xi32>
    %18 = arith.cmpi sge, %16, %17 : vector<1x256xi32>
    %c14_i32 = arith.constant 14 : i32
    %19 = vector.broadcast %c14_i32 : i32 to vector<1x256xi32>
    %20 = arith.cmpi sle, %16, %19 : vector<1x256xi32>
    %c16_i32_4 = arith.constant 16 : i32
    %21 = vector.broadcast %c16_i32_4 : i32 to vector<1x256xi32>
    %22 = arith.cmpi sge, %0, %21 : vector<1x256xi32>
    %c240_i32 = arith.constant 240 : i32
    %23 = vector.broadcast %c240_i32 : i32 to vector<1x256xi32>
    %24 = arith.cmpi slt, %0, %23 : vector<1x256xi32>
    %25 = arith.andi %22, %18 : vector<1x256xi1>
    %c0 = arith.constant 0 : index
    %c0_5 = arith.constant 0 : index
    %c0_6 = arith.constant 0 : index
    %26 = vector.load %arg3[%c0, %c0_5, %c0_6] : memref<9x8x8xf32, #tpu.memory_space<vmem>>, vector<1x8x8xf32>
    %27 = vector.shape_cast %26 : vector<1x8x8xf32> to vector<8x8xf32>
    %c1 = arith.constant 1 : index
    %c0_7 = arith.constant 0 : index
    %c0_8 = arith.constant 0 : index
    %28 = vector.load %arg3[%c1, %c0_7, %c0_8] : memref<9x8x8xf32, #tpu.memory_space<vmem>>, vector<1x8x8xf32>
    %29 = vector.shape_cast %28 : vector<1x8x8xf32> to vector<8x8xf32>
    %30 = arith.andi %22, %20 : vector<1x256xi1>
    %c2 = arith.constant 2 : index
    %c0_9 = arith.constant 0 : index
    %c0_10 = arith.constant 0 : index
    %31 = vector.load %arg3[%c2, %c0_9, %c0_10] : memref<9x8x8xf32, #tpu.memory_space<vmem>>, vector<1x8x8xf32>
    %32 = vector.shape_cast %31 : vector<1x8x8xf32> to vector<8x8xf32>
    %c3 = arith.constant 3 : index
    %c0_11 = arith.constant 0 : index
    %c0_12 = arith.constant 0 : index
    %33 = vector.load %arg3[%c3, %c0_11, %c0_12] : memref<9x8x8xf32, #tpu.memory_space<vmem>>, vector<1x8x8xf32>
    %34 = vector.shape_cast %33 : vector<1x8x8xf32> to vector<8x8xf32>
    %c4 = arith.constant 4 : index
    %c0_13 = arith.constant 0 : index
    %c0_14 = arith.constant 0 : index
    %35 = vector.load %arg3[%c4, %c0_13, %c0_14] : memref<9x8x8xf32, #tpu.memory_space<vmem>>, vector<1x8x8xf32>
    %36 = vector.shape_cast %35 : vector<1x8x8xf32> to vector<8x8xf32>
    %c5 = arith.constant 5 : index
    %c0_15 = arith.constant 0 : index
    %c0_16 = arith.constant 0 : index
    %37 = vector.load %arg3[%c5, %c0_15, %c0_16] : memref<9x8x8xf32, #tpu.memory_space<vmem>>, vector<1x8x8xf32>
    %38 = vector.shape_cast %37 : vector<1x8x8xf32> to vector<8x8xf32>
    %39 = arith.andi %24, %18 : vector<1x256xi1>
    %c6 = arith.constant 6 : index
    %c0_17 = arith.constant 0 : index
    %c0_18 = arith.constant 0 : index
    %40 = vector.load %arg3[%c6, %c0_17, %c0_18] : memref<9x8x8xf32, #tpu.memory_space<vmem>>, vector<1x8x8xf32>
    %41 = vector.shape_cast %40 : vector<1x8x8xf32> to vector<8x8xf32>
    %c7 = arith.constant 7 : index
    %c0_19 = arith.constant 0 : index
    %c0_20 = arith.constant 0 : index
    %42 = vector.load %arg3[%c7, %c0_19, %c0_20] : memref<9x8x8xf32, #tpu.memory_space<vmem>>, vector<1x8x8xf32>
    %43 = vector.shape_cast %42 : vector<1x8x8xf32> to vector<8x8xf32>
    %44 = arith.andi %24, %20 : vector<1x256xi1>
    %c8 = arith.constant 8 : index
    %c0_21 = arith.constant 0 : index
    %c0_22 = arith.constant 0 : index
    %45 = vector.load %arg3[%c8, %c0_21, %c0_22] : memref<9x8x8xf32, #tpu.memory_space<vmem>>, vector<1x8x8xf32>
    %46 = vector.shape_cast %45 : vector<1x8x8xf32> to vector<8x8xf32>
    %c0_23 = arith.constant 0 : index
    %c0_24 = arith.constant 0 : index
    %47 = vector.load %arg2[%c0_23, %c0_24] : memref<8x4xf32, #tpu.memory_space<vmem>>, vector<8x4xf32>
    %c0_25 = arith.constant 0 : index
    %c0_26 = arith.constant 0 : index
    %48 = vector.load %arg4[%c0_25, %c0_26] : memref<8x8xf32, #tpu.memory_space<vmem>>, vector<8x8xf32>
    %c0_27 = arith.constant 0 : index
    %c0_28 = arith.constant 0 : index
    %49 = vector.load %arg5[%c0_27, %c0_28] : memref<8x4xf32, #tpu.memory_space<vmem>>, vector<8x4xf32>
    %c0_29 = arith.constant 0 : index
    %c0_30 = arith.constant 0 : index
    %c0_31 = arith.constant 0 : index
    %50 = vector.load %arg1[%c0_29, %c0_30, %c0_31] : memref<1x4x256xf32, #tpu.memory_space<vmem>>, vector<1x4x256xf32>
    %51 = vector.shape_cast %50 : vector<1x4x256xf32> to vector<4x256xf32>
    %cst = arith.constant dense<0.000000e+00> : vector<8x256xf32>
    %52 = tpu.matmul %47, %51, %cst {dimension_numbers = #tpu.dot_dimension_numbers<[1], [0], [0], [1], [0, 0, 1, 1], [], []>} : vector<8x4xf32>, vector<4x256xf32>, vector<8x256xf32> -> vector<8x256xf32>
    %cst_32 = arith.constant dense<0.000000e+00> : vector<8xf32>
    %53 = vector.multi_reduction <add>, %52, %cst_32 [1] : vector<8x256xf32> to vector<8xf32>
    %54 = vector.shape_cast %53 : vector<8xf32> to vector<8x1xf32>
    %cst_33 = arith.constant 3.906250e-03 : f32
    %55 = vector.broadcast %cst_33 : f32 to vector<8x1xf32>
    %56 = arith.mulf %54, %55 : vector<8x1xf32>
    %57 = vector.broadcast %56 : vector<8x1xf32> to vector<8x256xf32>
    %58 = arith.subf %52, %57 : vector<8x256xf32>
    %59 = arith.mulf %58, %58 : vector<8x256xf32>
    %cst_34 = arith.constant dense<0.000000e+00> : vector<8xf32>
    %60 = vector.multi_reduction <add>, %59, %cst_34 [1] : vector<8x256xf32> to vector<8xf32>
    %61 = vector.shape_cast %60 : vector<8xf32> to vector<8x1xf32>
    %cst_35 = arith.constant 3.906250e-03 : f32
    %62 = vector.broadcast %cst_35 : f32 to vector<8x1xf32>
    %63 = arith.mulf %61, %62 : vector<8x1xf32>
    %cst_36 = arith.constant 9.99999974E-6 : f32
    %64 = vector.broadcast %cst_36 : f32 to vector<8x1xf32>
    %65 = arith.addf %63, %64 : vector<8x1xf32>
    %66 = math.rsqrt %65 : vector<8x1xf32>
    %67 = vector.broadcast %66 : vector<8x1xf32> to vector<8x256xf32>
    %68 = arith.mulf %58, %67 : vector<8x256xf32>
    %cst_37 = arith.constant 0.000000e+00 : f32
    %69 = vector.broadcast %cst_37 : f32 to vector<8x256xf32>
    %70 = arith.maximumf %68, %69 : vector<8x256xf32>
    %cst_38 = arith.constant 0.000000e+00 : f32
    %71 = vector.broadcast %cst_38 : f32 to vector<8x256xf32>
    %c17_i32 = arith.constant 17 : i32
    %72 = tpu.dynamic_rotate %70 by %c17_i32 dim 1 : vector<8x256xf32>, i32 -> vector<8x256xf32>
    %cst_39 = arith.constant 0.000000e+00 : f32
    %73 = vector.shape_cast %25 : vector<1x256xi1> to vector<1x256xi1>
    %74 = vector.broadcast %73 : vector<1x256xi1> to vector<8x256xi1>
    %75 = vector.broadcast %cst_39 : f32 to vector<8x256xf32>
    %76 = arith.select %74, %72, %75 : vector<8x256xi1>, vector<8x256xf32>
    %cst_40 = arith.constant dense<0.000000e+00> : vector<8x256xf32>
    %77 = tpu.matmul %27, %76, %cst_40 {dimension_numbers = #tpu.dot_dimension_numbers<[1], [0], [0], [1], [0, 0, 1, 1], [], []>} : vector<8x8xf32>, vector<8x256xf32>, vector<8x256xf32> -> vector<8x256xf32>
    %78 = arith.addf %71, %77 : vector<8x256xf32>
    %c16_i32_41 = arith.constant 16 : i32
    %79 = tpu.dynamic_rotate %70 by %c16_i32_41 dim 1 : vector<8x256xf32>, i32 -> vector<8x256xf32>
    %cst_42 = arith.constant 0.000000e+00 : f32
    %80 = vector.shape_cast %22 : vector<1x256xi1> to vector<1x256xi1>
    %81 = vector.broadcast %80 : vector<1x256xi1> to vector<8x256xi1>
    %82 = vector.broadcast %cst_42 : f32 to vector<8x256xf32>
    %83 = arith.select %81, %79, %82 : vector<8x256xi1>, vector<8x256xf32>
    %cst_43 = arith.constant dense<0.000000e+00> : vector<8x256xf32>
    %84 = tpu.matmul %29, %83, %cst_43 {dimension_numbers = #tpu.dot_dimension_numbers<[1], [0], [0], [1], [0, 0, 1, 1], [], []>} : vector<8x8xf32>, vector<8x256xf32>, vector<8x256xf32> -> vector<8x256xf32>
    %85 = arith.addf %78, %84 : vector<8x256xf32>
    %c15_i32 = arith.constant 15 : i32
    %86 = tpu.dynamic_rotate %70 by %c15_i32 dim 1 : vector<8x256xf32>, i32 -> vector<8x256xf32>
    %cst_44 = arith.constant 0.000000e+00 : f32
    %87 = vector.shape_cast %30 : vector<1x256xi1> to vector<1x256xi1>
    %88 = vector.broadcast %87 : vector<1x256xi1> to vector<8x256xi1>
    %89 = vector.broadcast %cst_44 : f32 to vector<8x256xf32>
    %90 = arith.select %88, %86, %89 : vector<8x256xi1>, vector<8x256xf32>
    %cst_45 = arith.constant dense<0.000000e+00> : vector<8x256xf32>
    %91 = tpu.matmul %32, %90, %cst_45 {dimension_numbers = #tpu.dot_dimension_numbers<[1], [0], [0], [1], [0, 0, 1, 1], [], []>} : vector<8x8xf32>, vector<8x256xf32>, vector<8x256xf32> -> vector<8x256xf32>
    %92 = arith.addf %85, %91 : vector<8x256xf32>
    %c1_i32_46 = arith.constant 1 : i32
    %93 = tpu.dynamic_rotate %70 by %c1_i32_46 dim 1 : vector<8x256xf32>, i32 -> vector<8x256xf32>
    %cst_47 = arith.constant 0.000000e+00 : f32
    %94 = vector.shape_cast %18 : vector<1x256xi1> to vector<1x256xi1>
    %95 = vector.broadcast %94 : vector<1x256xi1> to vector<8x256xi1>
    %96 = vector.broadcast %cst_47 : f32 to vector<8x256xf32>
    %97 = arith.select %95, %93, %96 : vector<8x256xi1>, vector<8x256xf32>
    %cst_48 = arith.constant dense<0.000000e+00> : vector<8x256xf32>
    %98 = tpu.matmul %34, %97, %cst_48 {dimension_numbers = #tpu.dot_dimension_numbers<[1], [0], [0], [1], [0, 0, 1, 1], [], []>} : vector<8x8xf32>, vector<8x256xf32>, vector<8x256xf32> -> vector<8x256xf32>
    %99 = arith.addf %92, %98 : vector<8x256xf32>
    %cst_49 = arith.constant dense<0.000000e+00> : vector<8x256xf32>
    %100 = tpu.matmul %36, %70, %cst_49 {dimension_numbers = #tpu.dot_dimension_numbers<[1], [0], [0], [1], [0, 0, 1, 1], [], []>} : vector<8x8xf32>, vector<8x256xf32>, vector<8x256xf32> -> vector<8x256xf32>
    %101 = arith.addf %99, %100 : vector<8x256xf32>
    %c255_i32 = arith.constant 255 : i32
    %102 = tpu.dynamic_rotate %70 by %c255_i32 dim 1 : vector<8x256xf32>, i32 -> vector<8x256xf32>
    %cst_50 = arith.constant 0.000000e+00 : f32
    %103 = vector.shape_cast %20 : vector<1x256xi1> to vector<1x256xi1>
    %104 = vector.broadcast %103 : vector<1x256xi1> to vector<8x256xi1>
    %105 = vector.broadcast %cst_50 : f32 to vector<8x256xf32>
    %106 = arith.select %104, %102, %105 : vector<8x256xi1>, vector<8x256xf32>
    %cst_51 = arith.constant dense<0.000000e+00> : vector<8x256xf32>
    %107 = tpu.matmul %38, %106, %cst_51 {dimension_numbers = #tpu.dot_dimension_numbers<[1], [0], [0], [1], [0, 0, 1, 1], [], []>} : vector<8x8xf32>, vector<8x256xf32>, vector<8x256xf32> -> vector<8x256xf32>
    %108 = arith.addf %101, %107 : vector<8x256xf32>
    %c241_i32 = arith.constant 241 : i32
    %109 = tpu.dynamic_rotate %70 by %c241_i32 dim 1 : vector<8x256xf32>, i32 -> vector<8x256xf32>
    %cst_52 = arith.constant 0.000000e+00 : f32
    %110 = vector.shape_cast %39 : vector<1x256xi1> to vector<1x256xi1>
    %111 = vector.broadcast %110 : vector<1x256xi1> to vector<8x256xi1>
    %112 = vector.broadcast %cst_52 : f32 to vector<8x256xf32>
    %113 = arith.select %111, %109, %112 : vector<8x256xi1>, vector<8x256xf32>
    %cst_53 = arith.constant dense<0.000000e+00> : vector<8x256xf32>
    %114 = tpu.matmul %41, %113, %cst_53 {dimension_numbers = #tpu.dot_dimension_numbers<[1], [0], [0], [1], [0, 0, 1, 1], [], []>} : vector<8x8xf32>, vector<8x256xf32>, vector<8x256xf32> -> vector<8x256xf32>
    %115 = arith.addf %108, %114 : vector<8x256xf32>
    %c240_i32_54 = arith.constant 240 : i32
    %116 = tpu.dynamic_rotate %70 by %c240_i32_54 dim 1 : vector<8x256xf32>, i32 -> vector<8x256xf32>
    %cst_55 = arith.constant 0.000000e+00 : f32
    %117 = vector.shape_cast %24 : vector<1x256xi1> to vector<1x256xi1>
    %118 = vector.broadcast %117 : vector<1x256xi1> to vector<8x256xi1>
    %119 = vector.broadcast %cst_55 : f32 to vector<8x256xf32>
    %120 = arith.select %118, %116, %119 : vector<8x256xi1>, vector<8x256xf32>
    %cst_56 = arith.constant dense<0.000000e+00> : vector<8x256xf32>
    %121 = tpu.matmul %43, %120, %cst_56 {dimension_numbers = #tpu.dot_dimension_numbers<[1], [0], [0], [1], [0, 0, 1, 1], [], []>} : vector<8x8xf32>, vector<8x256xf32>, vector<8x256xf32> -> vector<8x256xf32>
    %122 = arith.addf %115, %121 : vector<8x256xf32>
    %c239_i32 = arith.constant 239 : i32
    %123 = tpu.dynamic_rotate %70 by %c239_i32 dim 1 : vector<8x256xf32>, i32 -> vector<8x256xf32>
    %cst_57 = arith.constant 0.000000e+00 : f32
    %124 = vector.shape_cast %44 : vector<1x256xi1> to vector<1x256xi1>
    %125 = vector.broadcast %124 : vector<1x256xi1> to vector<8x256xi1>
    %126 = vector.broadcast %cst_57 : f32 to vector<8x256xf32>
    %127 = arith.select %125, %123, %126 : vector<8x256xi1>, vector<8x256xf32>
    %cst_58 = arith.constant dense<0.000000e+00> : vector<8x256xf32>
    %128 = tpu.matmul %46, %127, %cst_58 {dimension_numbers = #tpu.dot_dimension_numbers<[1], [0], [0], [1], [0, 0, 1, 1], [], []>} : vector<8x8xf32>, vector<8x256xf32>, vector<8x256xf32> -> vector<8x256xf32>
    %129 = arith.addf %122, %128 : vector<8x256xf32>
    %cst_59 = arith.constant dense<0.000000e+00> : vector<8xf32>
    %130 = vector.multi_reduction <add>, %129, %cst_59 [1] : vector<8x256xf32> to vector<8xf32>
    %131 = vector.shape_cast %130 : vector<8xf32> to vector<8x1xf32>
    %cst_60 = arith.constant 3.906250e-03 : f32
    %132 = vector.broadcast %cst_60 : f32 to vector<8x1xf32>
    %133 = arith.mulf %131, %132 : vector<8x1xf32>
    %134 = vector.broadcast %133 : vector<8x1xf32> to vector<8x256xf32>
    %135 = arith.subf %129, %134 : vector<8x256xf32>
    %136 = arith.mulf %135, %135 : vector<8x256xf32>
    %cst_61 = arith.constant dense<0.000000e+00> : vector<8xf32>
    %137 = vector.multi_reduction <add>, %136, %cst_61 [1] : vector<8x256xf32> to vector<8xf32>
    %138 = vector.shape_cast %137 : vector<8xf32> to vector<8x1xf32>
    %cst_62 = arith.constant 3.906250e-03 : f32
    %139 = vector.broadcast %cst_62 : f32 to vector<8x1xf32>
    %140 = arith.mulf %138, %139 : vector<8x1xf32>
    %cst_63 = arith.constant 9.99999974E-6 : f32
    %141 = vector.broadcast %cst_63 : f32 to vector<8x1xf32>
    %142 = arith.addf %140, %141 : vector<8x1xf32>
    %143 = math.rsqrt %142 : vector<8x1xf32>
    %144 = vector.broadcast %143 : vector<8x1xf32> to vector<8x256xf32>
    %145 = arith.mulf %135, %144 : vector<8x256xf32>
    %cst_64 = arith.constant 0.000000e+00 : f32
    %146 = vector.broadcast %cst_64 : f32 to vector<8x256xf32>
    %147 = arith.maximumf %145, %146 : vector<8x256xf32>
    %cst_65 = arith.constant dense<0.000000e+00> : vector<8x256xf32>
    %148 = tpu.matmul %48, %147, %cst_65 {dimension_numbers = #tpu.dot_dimension_numbers<[1], [0], [0], [1], [0, 0, 1, 1], [], []>} : vector<8x8xf32>, vector<8x256xf32>, vector<8x256xf32> -> vector<8x256xf32>
    %cst_66 = arith.constant dense<0.000000e+00> : vector<8xf32>
    %149 = vector.multi_reduction <add>, %148, %cst_66 [1] : vector<8x256xf32> to vector<8xf32>
    %150 = vector.shape_cast %149 : vector<8xf32> to vector<8x1xf32>
    %cst_67 = arith.constant 3.906250e-03 : f32
    %151 = vector.broadcast %cst_67 : f32 to vector<8x1xf32>
    %152 = arith.mulf %150, %151 : vector<8x1xf32>
    %153 = vector.broadcast %152 : vector<8x1xf32> to vector<8x256xf32>
    %154 = arith.subf %148, %153 : vector<8x256xf32>
    %155 = arith.mulf %154, %154 : vector<8x256xf32>
    %cst_68 = arith.constant dense<0.000000e+00> : vector<8xf32>
    %156 = vector.multi_reduction <add>, %155, %cst_68 [1] : vector<8x256xf32> to vector<8xf32>
    %157 = vector.shape_cast %156 : vector<8xf32> to vector<8x1xf32>
    %cst_69 = arith.constant 3.906250e-03 : f32
    %158 = vector.broadcast %cst_69 : f32 to vector<8x1xf32>
    %159 = arith.mulf %157, %158 : vector<8x1xf32>
    %cst_70 = arith.constant 9.99999974E-6 : f32
    %160 = vector.broadcast %cst_70 : f32 to vector<8x1xf32>
    %161 = arith.addf %159, %160 : vector<8x1xf32>
    %162 = math.rsqrt %161 : vector<8x1xf32>
    %163 = vector.broadcast %162 : vector<8x1xf32> to vector<8x256xf32>
    %164 = arith.mulf %154, %163 : vector<8x256xf32>
    %cst_71 = arith.constant 0.000000e+00 : f32
    %165 = vector.broadcast %cst_71 : f32 to vector<8x256xf32>
    %166 = arith.maximumf %164, %165 : vector<8x256xf32>
    %cst_72 = arith.constant dense<0.000000e+00> : vector<8x256xf32>
    %167 = tpu.matmul %49, %51, %cst_72 {dimension_numbers = #tpu.dot_dimension_numbers<[1], [0], [0], [1], [0, 0, 1, 1], [], []>} : vector<8x4xf32>, vector<4x256xf32>, vector<8x256xf32> -> vector<8x256xf32>
    %cst_73 = arith.constant dense<0.000000e+00> : vector<8xf32>
    %168 = vector.multi_reduction <add>, %167, %cst_73 [1] : vector<8x256xf32> to vector<8xf32>
    %169 = vector.shape_cast %168 : vector<8xf32> to vector<8x1xf32>
    %cst_74 = arith.constant 3.906250e-03 : f32
    %170 = vector.broadcast %cst_74 : f32 to vector<8x1xf32>
    %171 = arith.mulf %169, %170 : vector<8x1xf32>
    %172 = vector.broadcast %171 : vector<8x1xf32> to vector<8x256xf32>
    %173 = arith.subf %167, %172 : vector<8x256xf32>
    %174 = arith.mulf %173, %173 : vector<8x256xf32>
    %cst_75 = arith.constant dense<0.000000e+00> : vector<8xf32>
    %175 = vector.multi_reduction <add>, %174, %cst_75 [1] : vector<8x256xf32> to vector<8xf32>
    %176 = vector.shape_cast %175 : vector<8xf32> to vector<8x1xf32>
    %cst_76 = arith.constant 3.906250e-03 : f32
    %177 = vector.broadcast %cst_76 : f32 to vector<8x1xf32>
    %178 = arith.mulf %176, %177 : vector<8x1xf32>
    %cst_77 = arith.constant 9.99999974E-6 : f32
    %179 = vector.broadcast %cst_77 : f32 to vector<8x1xf32>
    %180 = arith.addf %178, %179 : vector<8x1xf32>
    %181 = math.rsqrt %180 : vector<8x1xf32>
    %182 = vector.broadcast %181 : vector<8x1xf32> to vector<8x256xf32>
    %183 = arith.mulf %173, %182 : vector<8x256xf32>
    %184 = arith.addf %166, %183 : vector<8x256xf32>
    %c0_78 = arith.constant 0 : index
    %c0_79 = arith.constant 0 : index
    %c0_80 = arith.constant 0 : index
    %185 = vector.load %arg6[%c0_78, %c0_79, %c0_80] : memref<1x8x256xf32, #tpu.memory_space<vmem>>, vector<1x8x256xf32>
    %186 = vector.shape_cast %185 : vector<1x8x256xf32> to vector<8x256xf32>
    %187 = vector.shape_cast %184 : vector<8x256xf32> to vector<1x8x256xf32>
    tpu.vector_store %arg6[%c0_78, %c0_79, %c0_80], %187 {strides = array<i32>} : memref<1x8x256xf32, #tpu.memory_space<vmem>>, vector<1x8x256xf32>,
    return
  }
  func.func @transform_0(%arg0: i32) -> (i32, i32, i32) {
    %c0_i32 = arith.constant 0 : i32
    %c0_i32_0 = arith.constant 0 : i32
    %c0_i32_1 = arith.constant 0 : i32
    return %arg0, %c0_i32, %c0_i32_0 : i32, i32, i32
  }
  func.func @transform_1(%arg0: i32) -> (i32, i32) {
    %c0_i32 = arith.constant 0 : i32
    %c0_i32_0 = arith.constant 0 : i32
    %c0_i32_1 = arith.constant 0 : i32
    return %c0_i32, %c0_i32_0 : i32, i32
  }
  func.func @transform_2(%arg0: i32) -> (i32, i32, i32) {
    %c0_i32 = arith.constant 0 : i32
    %c0_i32_0 = arith.constant 0 : i32
    %c0_i32_1 = arith.constant 0 : i32
    %c0_i32_2 = arith.constant 0 : i32
    return %c0_i32, %c0_i32_0, %c0_i32_1 : i32, i32, i32
  }
  func.func @transform_3(%arg0: i32) -> (i32, i32) {
    %c0_i32 = arith.constant 0 : i32
    %c0_i32_0 = arith.constant 0 : i32
    %c0_i32_1 = arith.constant 0 : i32
    return %c0_i32, %c0_i32_0 : i32, i32
  }
  func.func @transform_4(%arg0: i32) -> (i32, i32) {
    %c0_i32 = arith.constant 0 : i32
    %c0_i32_0 = arith.constant 0 : i32
    %c0_i32_1 = arith.constant 0 : i32
    return %c0_i32, %c0_i32_0 : i32, i32
  }
  func.func @transform_5(%arg0: i32) -> (i32, i32, i32) {
    %c0_i32 = arith.constant 0 : i32
    %c0_i32_0 = arith.constant 0 : i32
    %c0_i32_1 = arith.constant 0 : i32
    return %arg0, %c0_i32, %c0_i32_0 : i32, i32, i32
  }
}

</mosaic_0001>

<llo_original>
// kernel: tpu_custom_call.1
$region0: #{tpu_custom_call.1}
  #allocation0 [shape = 'u32[]', space=smem, size = 0x4, offset = 0x4, fixed_abs, tag = 'smem constant byte address 0x4 - core index']
  #allocation1 [shape = 'u32[144,128]{1,0:T(1,128)}', space=vmem, size = 0x12000, scoped, tag = 'internal scratch']
  %s0 = inlined_call_operand.vmem [shape: f32[2,4,256], index: 0, kind: input, shape index: {}]
  %s1 = inlined_call_operand.vmem [shape: f32[8,4], index: 1, kind: input, shape index: {}]
  %s2 = inlined_call_operand.vmem [shape: f32[9,8,8], index: 2, kind: input, shape index: {}]
  %s3 = inlined_call_operand.vmem [shape: f32[8,8], index: 3, kind: input, shape index: {}]
  %s4 = inlined_call_operand.vmem [shape: f32[8,4], index: 4, kind: input, shape index: {}]
  %s5 = inlined_call_operand.hbm [shape: f32[2,8,256], index: 5, kind: output, shape index: {}]
  %s6 = sld [smem:[#allocation0]]
  $region53: #{tpu_custom_call.1} parent=0
    _
  %s8 = ssub.s32 1, %s6
  %s9 = scalar_select 0, %s8, %s6
  $region1: #{tpu_custom_call.1} parent=0
    #allocation2 [shape = 'u8[16384]{0}', space=vmem, size = 0x4000, scoped, tag = 'output window, operand 0']
    #allocation3 [shape = 's32[2]{0}', space=sflag, size = 0x8, scoped, tag = 'scoped memory for tpu_custom_call.1']
    %10 = vsyncpa [#allocation3], 0
    %s11 = scalar_lea.sflag [#allocation3], 1
    %12 = vsyncpa %s11, 0
    loop: start=0, step=1, limit=4
    $region2: #{tpu_custom_call.1} parent=1 // loop_pre_header
      _
    $region3: #{tpu_custom_call.1} parent=1 // loop_header
      %s14 = sphi 0, %s18
      %p15 = scmp.ge.s32.totalorder %s14, 4
      %s24 = sphi 0, %s26
      %s27 = sphi 0, %s24
      %s28 = sphi 0, %s27
      %s44 = sphi 0, %s28
      %s48 = sphi 0, %s48
      %s50 = sphi 0, %s48
      %s51 = sphi 0, %s50
      %s65 = sphi 0, %s51
      %s69 = sphi 0, %s69
      %s71 = sphi 0, %s69
      %s72 = sphi 0, %s71
      %s86 = sphi 0, %s72
      %s90 = sphi 0, %s90
      %s92 = sphi 0, %s90
      %s93 = sphi 0, %s92
      %s107 = sphi 0, %s93
      %s111 = sphi 0, %s111
      %s113 = sphi 0, %s111
      %s114 = sphi 0, %s113
      %s128 = sphi 0, %s114
      %s134 = sphi 0, %s136
      %s137 = sphi 0, %s134
      %s138 = sphi 0, %s137
      %s154 = sphi 0, %s138
    $region4: #{tpu_custom_call.1} parent=1 // loop_header_branch
      %17 = sbr.rel (%p15) target = $region8
    $region5: #{tpu_custom_call.1} parent=1 // loop_body
      %s19 = ssub.s32 %s14, 1
      %s20 = ssub.s32 %s14, 2
      %s21 = sadd.s32 %s14, 1
      %s22 = ssub.s32 %s14, %s21
      %p23 = scmp.eq.s32.totalorder %s22, 0
      %s25 = sadd.s32 %s24, 1
      %s26 = scalar_select %p23, %s24, %s25
      %p29 = pneg %p23
      %p30 = scmp.eq.s32.totalorder %s14, 1
      %p31 = por %p29, %p30
      %p32 = scmp.ne.s32.totalorder %s24, %s27
      %p33 = scmp.eq.s32.totalorder %s14, 0
      %p34 = por %p32, %p33
      %p35 = scmp.ne.s32.totalorder %s24, %s27
      %p36 = scmp.eq.s32.totalorder %s19, 1
      %p37 = por %p35, %p36
      %p38 = scmp.ne.s32.totalorder %s27, %s28
      %p39 = scmp.eq.s32.totalorder %s19, 0
      %p40 = por %p38, %p39
      %p41 = scmp.ne.s32.totalorder %s27, %s28
      %p42 = scmp.eq.s32.totalorder %s20, 1
      %p43 = por %p41, %p42
      %p45 = scmp.ne.s32.totalorder %s28, %s44
      %p46 = scmp.eq.s32.totalorder %s20, 0
      %p47 = por %p45, %p46
      %s49 = sadd.s32 %s48, 1
      %p52 = scmp.eq.s32.totalorder %s14, 1
      %p53 = scmp.ne.s32.totalorder %s48, %s50
      %p54 = scmp.eq.s32.totalorder %s14, 0
      %p55 = por %p53, %p54
      %p56 = scmp.ne.s32.totalorder %s48, %s50
      %p57 = scmp.eq.s32.totalorder %s19, 1
      %p58 = por %p56, %p57
      %p59 = scmp.ne.s32.totalorder %s50, %s51
      %p60 = scmp.eq.s32.totalorder %s19, 0
      %p61 = por %p59, %p60
      %p62 = scmp.ne.s32.totalorder %s50, %s51
      %p63 = scmp.eq.s32.totalorder %s20, 1
      %p64 = por %p62, %p63
      %p66 = scmp.ne.s32.totalorder %s51, %s65
      %p67 = scmp.eq.s32.totalorder %s20, 0
      %p68 = por %p66, %p67
      %s70 = sadd.s32 %s69, 1
      %p73 = scmp.eq.s32.totalorder %s14, 1
      %p74 = scmp.ne.s32.totalorder %s69, %s71
      %p75 = scmp.eq.s32.totalorder %s14, 0
      %p76 = por %p74, %p75
      %p77 = scmp.ne.s32.totalorder %s69, %s71
      %p78 = scmp.eq.s32.totalorder %s19, 1
      %p79 = por %p77, %p78
      %p80 = scmp.ne.s32.totalorder %s71, %s72
      %p81 = scmp.eq.s32.totalorder %s19, 0
      %p82 = por %p80, %p81
      %p83 = scmp.ne.s32.totalorder %s71, %s72
      %p84 = scmp.eq.s32.totalorder %s20, 1
      %p85 = por %p83, %p84
      %p87 = scmp.ne.s32.totalorder %s72, %s86
      %p88 = scmp.eq.s32.totalorder %s20, 0
      %p89 = por %p87, %p88
      %s91 = sadd.s32 %s90, 1
      %p94 = scmp.eq.s32.totalorder %s14, 1
      %p95 = scmp.ne.s32.totalorder %s90, %s92
      %p96 = scmp.eq.s32.totalorder %s14, 0
      %p97 = por %p95, %p96
      %p98 = scmp.ne.s32.totalorder %s90, %s92
      %p99 = scmp.eq.s32.totalorder %s19, 1
      %p100 = por %p98, %p99
      %p101 = scmp.ne.s32.totalorder %s92, %s93
      %p102 = scmp.eq.s32.totalorder %s19, 0
      %p103 = por %p101, %p102
      %p104 = scmp.ne.s32.totalorder %s92, %s93
      %p105 = scmp.eq.s32.totalorder %s20, 1
      %p106 = por %p104, %p105
      %p108 = scmp.ne.s32.totalorder %s93, %s107
      %p109 = scmp.eq.s32.totalorder %s20, 0
      %p110 = por %p108, %p109
      %s112 = sadd.s32 %s111, 1
      %p115 = scmp.eq.s32.totalorder %s14, 1
      %p116 = scmp.ne.s32.totalorder %s111, %s113
      %p117 = scmp.eq.s32.totalorder %s14, 0
      %p118 = por %p116, %p117
      %p119 = scmp.ne.s32.totalorder %s111, %s113
      %p120 = scmp.eq.s32.totalorder %s19, 1
      %p121 = por %p119, %p120
      %p122 = scmp.ne.s32.totalorder %s113, %s114
      %p123 = scmp.eq.s32.totalorder %s19, 0
      %p124 = por %p122, %p123
      %p125 = scmp.ne.s32.totalorder %s113, %s114
      %p126 = scmp.eq.s32.totalorder %s20, 1
      %p127 = por %p125, %p126
      %p129 = scmp.ne.s32.totalorder %s114, %s128
      %p130 = scmp.eq.s32.totalorder %s20, 0
      %p131 = por %p129, %p130
      %s132 = ssub.s32 %s14, %s21
      %p133 = scmp.eq.s32.totalorder %s132, 0
      %s135 = sadd.s32 %s134, 1
      %s136 = scalar_select %p133, %s134, %s135
      %p139 = pneg %p133
      %p140 = scmp.eq.s32.totalorder %s14, 1
      %p141 = por %p139, %p140
      %p142 = scmp.ne.s32.totalorder %s134, %s137
      %p143 = scmp.eq.s32.totalorder %s14, 0
      %p144 = por %p142, %p143
      %p145 = scmp.ne.s32.totalorder %s134, %s137
      %p146 = scmp.eq.s32.totalorder %s19, 1
      %p147 = por %p145, %p146
      %p148 = scmp.ne.s32.totalorder %s137, %s138
      %p149 = scmp.eq.s32.totalorder %s19, 0
      %p150 = por %p148, %p149
      %p151 = scmp.ne.s32.totalorder %s137, %s138
      %p152 = scmp.eq.s32.totalorder %s20, 1
      %p153 = por %p151, %p152
      %p155 = scmp.ne.s32.totalorder %s138, %s154
      %p156 = scmp.eq.s32.totalorder %s20, 0
      %p157 = por %p155, %p156
      %p158 = scmp.le.s32.totalorder 1, %s14
      %p159 = scmp.lt.s32.totalorder %s14, 3
      %p160 = pnand %p158, %p159
      %p161 = pneg %p160
      // Predicated region
      $region9: #{tpu_custom_call.1} parent=5 // pred_check
        _
      $region10: #{tpu_custom_call.1} parent=5 // pred_check_branch
        %163 = sbr.rel (%p160) target = $region12
      $region11: #{tpu_custom_call.1} parent=5 // pred_region
        %s164 = ssub.s32 %s14, 1
        // Predicated region
        $region13: #{tpu_custom_call.1} parent=11 // pred_check
          %p165 = pneg %p61
        $region14: #{tpu_custom_call.1} parent=11 // pred_check_branch
          %167 = sbr.rel (%p165) target = $region16
        $region15: #{tpu_custom_call.1} parent=11 // pred_region
          _
        $region16: #{tpu_custom_call.1} parent=11 // pred_fallthru
          _
        // Predicated region
        $region17: #{tpu_custom_call.1} parent=11 // pred_check
          %p168 = pneg %p82
        $region18: #{tpu_custom_call.1} parent=11 // pred_check_branch
          %170 = sbr.rel (%p168) target = $region20
        $region19: #{tpu_custom_call.1} parent=11 // pred_region
          _
        $region20: #{tpu_custom_call.1} parent=11 // pred_fallthru
          _
        // Predicated region
        $region21: #{tpu_custom_call.1} parent=11 // pred_check
          %p171 = pneg %p103
        $region22: #{tpu_custom_call.1} parent=11 // pred_check_branch
          %173 = sbr.rel (%p171) target = $region24
        $region23: #{tpu_custom_call.1} parent=11 // pred_region
          _
        $region24: #{tpu_custom_call.1} parent=11 // pred_fallthru
          _
        // Predicated region
        $region25: #{tpu_custom_call.1} parent=11 // pred_check
          %p174 = pneg %p124
        $region26: #{tpu_custom_call.1} parent=11 // pred_check_branch
          %176 = sbr.rel (%p174) target = $region28
        $region27: #{tpu_custom_call.1} parent=11 // pred_region
          _
        $region28: #{tpu_custom_call.1} parent=11 // pred_fallthru
          _
      $region12: #{tpu_custom_call.1} parent=5 // pred_fallthru
        _
      %p177 = scmp.lt.s32.totalorder %s14, 2
      // Predicated region
      $region29: #{tpu_custom_call.1} parent=5 // pred_check
        %p178 = pneg %p177
      $region30: #{tpu_custom_call.1} parent=5 // pred_check_branch
        %180 = sbr.rel (%p178) target = $region32
      $region31: #{tpu_custom_call.1} parent=5 // pred_region
        // Predicated region
        $region33: #{tpu_custom_call.1} parent=31 // pred_check
          %p181 = pneg %p34
        $region34: #{tpu_custom_call.1} parent=31 // pred_check_branch
          %183 = sbr.rel (%p181) target = $region36
        $region35: #{tpu_custom_call.1} parent=31 // pred_region
          %p184 = scmp.lt.s32.totalorder %s14, 1
          %s185 = scalar_select %p184, %s14, 1
          %s186 = smul.addr %s185, 2
          %s187 = smul.addr %s186, 4
          %s188 = scalar_lea.vmem %s0, %s187
        $region36: #{tpu_custom_call.1} parent=31 // pred_fallthru
          _
      $region32: #{tpu_custom_call.1} parent=5 // pred_fallthru
        _
      %p189 = scmp.le.s32.totalorder 1, %s14
      %p190 = scmp.lt.s32.totalorder %s14, 3
      %p191 = pnand %p189, %p190
      %p192 = pneg %p191
      // Predicated region
      $region37: #{tpu_custom_call.1} parent=5 // pred_check
        _
      $region38: #{tpu_custom_call.1} parent=5 // pred_check_branch
        %194 = sbr.rel (%p191) target = $region40
      $region39: #{tpu_custom_call.1} parent=5 // pred_region
        %s195 = ssub.s32 %s14, 1
        %p196 = scmp.lt.s32.totalorder %s19, 1
        %s197 = scalar_select %p196, %s19, 1
        %s198 = smul.addr %s197, 2
        %s199 = smul.addr %s198, 4
        %s200 = scalar_lea.vmem %s0, %s199
        %p201 = pneg %p40
        %p202 = pneg %p37
        %p203 = pneg %p61
        %p204 = pneg %p58
        %p205 = pneg %p82
        %p206 = pneg %p79
        %p207 = pneg %p103
        %p208 = pneg %p100
        %p209 = pneg %p124
        %p210 = pneg %p121
        %p211 = pneg %p150
        %p212 = pneg %p147
        %s213 = sand.u32 %s137, 1
        %s214 = scalar_lea.sflag [#allocation3], %s213
        %s215 = sand.u32 %s137, 1
        %s216 = smul.addr %s215, 16
        %s217 = scalar_lea.vmem [#allocation2], %s216
        %p218 = scmp.lt.s32.totalorder %s19, 1
        %s219 = scalar_select %p218, %s19, 1
        %s220 = smul.addr %s219, 2
        %s221 = smul.addr %s220, 4
        %s222 = scalar_lea.vmem %s0, %s221
        %v223 = vlaneseq
        %v224 = vand.u32 %v223, 127
        %v225 = vadd.s32 %v224, 128
        %vm226 = vcmp.lt.s32.totalorder %v224, 0
        %v227 = vsub.s32 0, %v224
        %v228 = vsel %vm226, %v227, %v224
        %v229 = vshrl.u32 %v228, 4
        %v230 = vand.u32 %v228, 15
        %v231 = vsub.s32 0, %v230
        %v232 = vsel %vm226, %v231, %v230
        %vm233 = vcmp.lt.s32.totalorder %v225, 0
        %v234 = vsub.s32 0, %v225
        %v235 = vsel %vm233, %v234, %v225
        %v236 = vshrl.u32 %v235, 4
        %v237 = vand.u32 %v235, 15
        %v238 = vsub.s32 0, %v237
        %v239 = vsel %vm233, %v238, %v237
        %vm240 = vcmp.ne.s32.totalorder %v232, 0
        %vm241 = vcmp.ne.s32.totalorder %v239, 0
        %vm242 = vcmp.lt.s32.totalorder %v232, 0
        %vm243 = vcmp.lt.s32.totalorder %v239, 0
        %vm244 = vmand %vm242, %vm240
        %vm245 = vmand %vm243, %vm241
        %v246 = vadd.s32 %v232, 16
        %v247 = vadd.s32 %v239, 16
        %v248 = vsel %vm244, %v246, %v232
        %v249 = vsel %vm245, %v247, %v239
        %vm250 = vcmp.ge.s32.totalorder %v248, 1
        %vm251 = vcmp.ge.s32.totalorder %v249, 1
        %vm252 = vcmp.le.s32.totalorder %v248, 14
        %vm253 = vcmp.le.s32.totalorder %v249, 14
        %vm254 = vcmp.ge.s32.totalorder %v224, 16
        %vm255 = vcmp.ge.s32.totalorder %v225, 16
        %vm256 = vcmp.lt.s32.totalorder %v224, 240
        %vm257 = vcmp.lt.s32.totalorder %v225, 240
        %vm258 = vmand %vm254, %vm250
        %vm259 = vmand %vm255, %vm251
        %v260 = vld [vmem:[%s2] sm:$0xff]
        %s261 = scalar_lea.vmem %s2, 8
        %v262 = vld [vmem:[%s261] sm:$0xff]
        %vm263 = vmand %vm254, %vm252
        %vm264 = vmand %vm255, %vm253
        %s265 = scalar_lea.vmem %s2, 16
        %v266 = vld [vmem:[%s265] sm:$0xff]
        %s267 = scalar_lea.vmem %s2, 24
        %v268 = vld [vmem:[%s267] sm:$0xff]
        %s269 = scalar_lea.vmem %s2, 32
        %v270 = vld [vmem:[%s269] sm:$0xff]
        %s271 = scalar_lea.vmem %s2, 40
        %v272 = vld [vmem:[%s271] sm:$0xff]
        %vm273 = vmand %vm256, %vm250
        %vm274 = vmand %vm257, %vm251
        %s275 = scalar_lea.vmem %s2, 48
        %v276 = vld [vmem:[%s275] sm:$0xff]
        %s277 = scalar_lea.vmem %s2, 56
        %v278 = vld [vmem:[%s277] sm:$0xff]
        %vm279 = vmand %vm256, %vm252
        %vm280 = vmand %vm257, %vm253
        %s281 = scalar_lea.vmem %s2, 64
        %v282 = vld [vmem:[%s281] sm:$0xff]
        %v283 = vld [vmem:[%s1] sm:$0xff]
        %v284 = vld [vmem:[%s3] sm:$0xff]
        %v285 = vld [vmem:[%s4] sm:$0xff]
        %v286 = vld [vmem:[%s222] sm:$0xff]
        %v288 = vcombine.high %v286, %v286
        %vm289 = vcmask 31744
        %v291 = vsel %vm289, %v283, 0
        %vm293 = vcmask 1043456
        %v294 = vsel %vm293, %v286, 0
        %v296 = vsel %vm293, %v288, 0
        %298 = vmatprep.subr.mxu0 %v296
        %299 = vmatpush1.msra.mxu0 %v294
        %300 = vmatprep.subr.mxu0 0.0
        %301 = vmatpush1.msra.mxu0 0.0
        %302 = vmatprep.subr.mxu0 0.0
        %303 = vmatpush1.msra.mxu0 0.0
        %304 = vmatprep.subr.mxu0 0.0
        %305 = vmatpush1.msra.mxu0 0.0
        %306 = vmatprep.subr.mxu0 0.0
        %307 = vmatpush1.msra.mxu0 0.0
        %308 = vmatprep.subr.mxu0 0.0
        %309 = vmatpush1.msra.mxu0 0.0
        %310 = vmatprep.subr.mxu0 0.0
        %311 = vmatpush1.msra.mxu0 0.0
        %312 = vmatprep.subr.mxu0 0.0
        %313 = vmatpush1.msra.mxu0 0.0
        %314 = vmatprep.subr.mxu0 0.0
        %315 = vmatpush1.msra.mxu0 0.0
        %316 = vmatprep.subr.mxu0 0.0
        %317 = vmatpush1.msra.mxu0 0.0
        %318 = vmatprep.subr.mxu0 0.0
        %319 = vmatpush1.msra.mxu0 0.0
        %320 = vmatprep.subr.mxu0 0.0
        %321 = vmatpush1.msra.mxu0 0.0
        %322 = vmatprep.subr.mxu0 0.0
        %323 = vmatpush1.msra.mxu0 0.0
        %324 = vmatprep.subr.mxu0 0.0
        %325 = vmatpush1.msra.mxu0 0.0
        %326 = vmatprep.subr.mxu0 0.0
        %327 = vmatpush1.msra.mxu0 0.0
        %328 = vmatprep.subr.mxu0 0.0
        %329 = vmatpush1.msra.mxu0 0.0
        %330 = vmatprep.subr.mxu0 0.0
        %331 = vmatpush1.msra.mxu0 0.0
        %332 = vmatprep.subr.mxu0 0.0
        %333 = vmatpush1.msra.mxu0 0.0
        %334 = vmatprep.subr.mxu0 0.0
        %335 = vmatpush1.msra.mxu0 0.0
        %336 = vmatprep.subr.mxu0 0.0
        %337 = vmatpush1.msra.mxu0 0.0
        %338 = vmatprep.subr.mxu0 0.0
        %339 = vmatpush1.msra.mxu0 0.0
        %340 = vmatprep.subr.mxu0 0.0
        %341 = vmatpush1.msra.mxu0 0.0
        %342 = vmatprep.subr.mxu0 0.0
        %343 = vmatpush1.msra.mxu0 0.0
        %344 = vmatprep.subr.mxu0 0.0
        %345 = vmatpush1.msra.mxu0 0.0
        %346 = vmatprep.subr.mxu0 0.0
        %347 = vmatpush1.msra.mxu0 0.0
        %348 = vmatprep.subr.mxu0 0.0
        %349 = vmatpush1.msra.mxu0 0.0
        %350 = vmatprep.subr.mxu0 0.0
        %351 = vmatpush1.msra.mxu0 0.0
        %352 = vmatprep.subr.mxu0 0.0
        %353 = vmatpush1.msra.mxu0 0.0
        %354 = vmatprep.subr.mxu0 0.0
        %355 = vmatpush1.msra.mxu0 0.0
        %356 = vmatprep.subr.mxu0 0.0
        %357 = vmatpush1.msra.mxu0 0.0
        %358 = vmatprep.subr.mxu0 0.0
        %359 = vmatpush1.msra.mxu0 0.0
        %360 = vmatprep.subr.mxu0 0.0
        %361 = vmatpush1.msra.mxu0 0.0
        %362 = vmatprep.mubr.f32.mxu0 0.0
        %363 = vmatmul.mubr.f32.gmra.mrb[0].mxu0 %v291
        %v364 = vpop.f32.mrb[0].mxu0
        %v365 = vadd.f32 0.0, %v364
        %v366 = vpop.f32.mrb[0].mxu0
        %v367 = vadd.f32 0.0, %v366
        %368 = vdwg.mxu0
        %v369 = vadd.f32 %v365, %v367
        %370 = vadd.xlane.f32.xlu0 %v369
        %v371 = vpop.xlane.xlu0 %370
        %v372 = vmul.f32 %v371, 0.00390625
        %v373 = vsub.f32 %v365, %v372
        %v374 = vsub.f32 %v367, %v372
        %v375 = vmul.f32 %v373, %v373
        %v376 = vmul.f32 %v374, %v374
        %v377 = vadd.f32 %v375, %v376
        %378 = vadd.xlane.f32.xlu0 %v377
        %v379 = vpop.xlane.xlu0 %378
        %v380 = vmul.f32 %v379, 0.00390625
        %v381 = vadd.f32 %v380, 1e-05
        %v382 = vrsqrt.pop %v381
        %v383 = vmul.f32 %v373, %v382
        %v384 = vmul.f32 %v374, %v382
        %v385 = vmax.f32 %v383, 0.0
        %v386 = vmax.f32 %v384, 0.0
        %387 = vrot.lane.b32.xlu0 %v385, 17
        %v388 = vpop.permute.xlu0 %387
        %389 = vrot.lane.b32.xlu0 %v386, 17
        %v390 = vpop.permute.xlu0 %389
        %vm391 = vcmp.lt.s32.totalorder %v224, 17
        %v392 = vsel %vm391, %v388, %v390
        %v393 = vsel %vm391, %v390, %v388
        %v394 = vsel %vm258, 1, 0
        %v395 = vsel %vm259, 1, 0
        %vm396 = vcmp.eq.s32.totalorder %v394, 1
        %vm397 = vcmp.eq.s32.totalorder %v395, 1
        %v398 = vsel %vm396, %v393, 0.0
        %v399 = vsel %vm397, %v392, 0.0
        %400 = vrot.lane.b32.xlu0 %v385, 16
        %v401 = vpop.permute.xlu0 %400
        %402 = vrot.lane.b32.xlu0 %v386, 16
        %v403 = vpop.permute.xlu0 %402
        %vm404 = vcmp.lt.s32.totalorder %v224, 16
        %v405 = vsel %vm404, %v401, %v403
        %v406 = vsel %vm404, %v403, %v401
        %v407 = vsel %vm254, 1, 0
        %v408 = vsel %vm255, 1, 0
        %vm409 = vcmp.eq.s32.totalorder %v407, 1
        %vm410 = vcmp.eq.s32.totalorder %v408, 1
        %v411 = vsel %vm409, %v406, 0.0
        %v412 = vsel %vm410, %v405, 0.0
        %vm413 = vcmask 64512
        %v415 = vsel %vm413, %v262, 0
        %417 = vmatprep.subr.mxu0 %v412
        %418 = vmatpush1.msra.mxu0 %v411
        %419 = vmatprep.subr.mxu0 0.0
        %420 = vmatpush1.msra.mxu0 0.0
        %421 = vmatprep.subr.mxu0 0.0
        %422 = vmatpush1.msra.mxu0 0.0
        %423 = vmatprep.subr.mxu0 0.0
        %424 = vmatpush1.msra.mxu0 0.0
        %425 = vmatprep.subr.mxu0 0.0
        %426 = vmatpush1.msra.mxu0 0.0
        %427 = vmatprep.subr.mxu0 0.0
        %428 = vmatpush1.msra.mxu0 0.0
        %429 = vmatprep.subr.mxu0 0.0
        %430 = vmatpush1.msra.mxu0 0.0
        %431 = vmatprep.subr.mxu0 0.0
        %432 = vmatpush1.msra.mxu0 0.0
        %433 = vmatprep.subr.mxu0 0.0
        %434 = vmatpush1.msra.mxu0 0.0
        %435 = vmatprep.subr.mxu0 0.0
        %436 = vmatpush1.msra.mxu0 0.0
        %437 = vmatprep.subr.mxu0 0.0
        %438 = vmatpush1.msra.mxu0 0.0
        %439 = vmatprep.subr.mxu0 0.0
        %440 = vmatpush1.msra.mxu0 0.0
        %441 = vmatprep.subr.mxu0 0.0
        %442 = vmatpush1.msra.mxu0 0.0
        %443 = vmatprep.subr.mxu0 0.0
        %444 = vmatpush1.msra.mxu0 0.0
        %445 = vmatprep.subr.mxu0 0.0
        %446 = vmatpush1.msra.mxu0 0.0
        %447 = vmatprep.subr.mxu0 0.0
        %448 = vmatpush1.msra.mxu0 0.0
        %449 = vmatprep.subr.mxu0 0.0
        %450 = vmatpush1.msra.mxu0 0.0
        %451 = vmatprep.subr.mxu0 0.0
        %452 = vmatpush1.msra.mxu0 0.0
        %453 = vmatprep.subr.mxu0 0.0
        %454 = vmatpush1.msra.mxu0 0.0
        %455 = vmatprep.subr.mxu0 0.0
        %456 = vmatpush1.msra.mxu0 0.0
        %457 = vmatprep.subr.mxu0 0.0
        %458 = vmatpush1.msra.mxu0 0.0
        %459 = vmatprep.subr.mxu0 0.0
        %460 = vmatpush1.msra.mxu0 0.0
        %461 = vmatprep.subr.mxu0 0.0
        %462 = vmatpush1.msra.mxu0 0.0
        %463 = vmatprep.subr.mxu0 0.0
        %464 = vmatpush1.msra.mxu0 0.0
        %465 = vmatprep.subr.mxu0 0.0
        %466 = vmatpush1.msra.mxu0 0.0
        %467 = vmatprep.subr.mxu0 0.0
        %468 = vmatpush1.msra.mxu0 0.0
        %469 = vmatprep.subr.mxu0 0.0
        %470 = vmatpush1.msra.mxu0 0.0
        %471 = vmatprep.subr.mxu0 0.0
        %472 = vmatpush1.msra.mxu0 0.0
        %473 = vmatprep.subr.mxu0 0.0
        %474 = vmatpush1.msra.mxu0 0.0
        %475 = vmatprep.subr.mxu0 0.0
        %476 = vmatpush1.msra.mxu0 0.0
        %477 = vmatprep.subr.mxu0 0.0
        %478 = vmatpush1.msra.mxu0 0.0
        %479 = vmatprep.subr.mxu0 0.0
        %480 = vmatpush1.msra.mxu0 0.0
        %481 = vmatprep.mubr.f32.mxu0 0.0
        %482 = vmatmul.mubr.f32.gmra.mrb[0].mxu0 %v415
        %v483 = vpop.f32.mrb[0].mxu0
        %v484 = vadd.f32 0.0, %v483
        %v485 = vpop.f32.mrb[0].mxu0
        %v486 = vadd.f32 0.0, %v485
        %487 = vdwg.mxu0
        %v489 = vsel %vm413, %v260, 0
        %491 = vmatprep.subr.mxu0 %v399
        %492 = vmatpush1.msra.mxu0 %v398
        %493 = vmatprep.subr.mxu0 0.0
        %494 = vmatpush1.msra.mxu0 0.0
        %495 = vmatprep.subr.mxu0 0.0
        %496 = vmatpush1.msra.mxu0 0.0
        %497 = vmatprep.subr.mxu0 0.0
        %498 = vmatpush1.msra.mxu0 0.0
        %499 = vmatprep.subr.mxu0 0.0
        %500 = vmatpush1.msra.mxu0 0.0
        %501 = vmatprep.subr.mxu0 0.0
        %502 = vmatpush1.msra.mxu0 0.0
        %503 = vmatprep.subr.mxu0 0.0
        %504 = vmatpush1.msra.mxu0 0.0
        %505 = vmatprep.subr.mxu0 0.0
        %506 = vmatpush1.msra.mxu0 0.0
        %507 = vmatprep.subr.mxu0 0.0
        %508 = vmatpush1.msra.mxu0 0.0
        %509 = vmatprep.subr.mxu0 0.0
        %510 = vmatpush1.msra.mxu0 0.0
        %511 = vmatprep.subr.mxu0 0.0
        %512 = vmatpush1.msra.mxu0 0.0
        %513 = vmatprep.subr.mxu0 0.0
        %514 = vmatpush1.msra.mxu0 0.0
        %515 = vmatprep.subr.mxu0 0.0
        %516 = vmatpush1.msra.mxu0 0.0
        %517 = vmatprep.subr.mxu0 0.0
        %518 = vmatpush1.msra.mxu0 0.0
        %519 = vmatprep.subr.mxu0 0.0
        %520 = vmatpush1.msra.mxu0 0.0
        %521 = vmatprep.subr.mxu0 0.0
        %522 = vmatpush1.msra.mxu0 0.0
        %523 = vmatprep.subr.mxu0 0.0
        %524 = vmatpush1.msra.mxu0 0.0
        %525 = vmatprep.subr.mxu0 0.0
        %526 = vmatpush1.msra.mxu0 0.0
        %527 = vmatprep.subr.mxu0 0.0
        %528 = vmatpush1.msra.mxu0 0.0
        %529 = vmatprep.subr.mxu0 0.0
        %530 = vmatpush1.msra.mxu0 0.0
        %531 = vmatprep.subr.mxu0 0.0
        %532 = vmatpush1.msra.mxu0 0.0
        %533 = vmatprep.subr.mxu0 0.0
        %534 = vmatpush1.msra.mxu0 0.0
        %535 = vmatprep.subr.mxu0 0.0
        %536 = vmatpush1.msra.mxu0 0.0
        %537 = vmatprep.subr.mxu0 0.0
        %538 = vmatpush1.msra.mxu0 0.0
        %539 = vmatprep.subr.mxu0 0.0
        %540 = vmatpush1.msra.mxu0 0.0
        %541 = vmatprep.subr.mxu0 0.0
        %542 = vmatpush1.msra.mxu0 0.0
        %543 = vmatprep.subr.mxu0 0.0
        %544 = vmatpush1.msra.mxu0 0.0
        %545 = vmatprep.subr.mxu0 0.0
        %546 = vmatpush1.msra.mxu0 0.0
        %547 = vmatprep.subr.mxu0 0.0
        %548 = vmatpush1.msra.mxu0 0.0
        %549 = vmatprep.subr.mxu0 0.0
        %550 = vmatpush1.msra.mxu0 0.0
        %551 = vmatprep.subr.mxu0 0.0
        %552 = vmatpush1.msra.mxu0 0.0
        %553 = vmatprep.subr.mxu0 0.0
        %554 = vmatpush1.msra.mxu0 0.0
        %555 = vmatprep.mubr.f32.mxu0 0.0
        %556 = vmatmul.mubr.f32.gmra.mrb[0].mxu0 %v489
        %v557 = vpop.f32.mrb[0].mxu0
        %v558 = vadd.f32 %v484, %v557
        %v559 = vpop.f32.mrb[0].mxu0
        %v560 = vadd.f32 %v486, %v559
        %561 = vdwg.mxu0
        %562 = vrot.lane.b32.xlu0 %v385, 15
        %v563 = vpop.permute.xlu0 %562
        %564 = vrot.lane.b32.xlu0 %v386, 15
        %v565 = vpop.permute.xlu0 %564
        %vm566 = vcmp.lt.s32.totalorder %v224, 15
        %v567 = vsel %vm566, %v563, %v565
        %v568 = vsel %vm566, %v565, %v563
        %v569 = vsel %vm263, 1, 0
        %v570 = vsel %vm264, 1, 0
        %vm571 = vcmp.eq.s32.totalorder %v569, 1
        %vm572 = vcmp.eq.s32.totalorder %v570, 1
        %v573 = vsel %vm571, %v568, 0.0
        %v574 = vsel %vm572, %v567, 0.0
        %v576 = vsel %vm413, %v266, 0
        %578 = vmatprep.subr.mxu0 %v574
        %579 = vmatpush1.msra.mxu0 %v573
        %580 = vmatprep.subr.mxu0 0.0
        %581 = vmatpush1.msra.mxu0 0.0
        %582 = vmatprep.subr.mxu0 0.0
        %583 = vmatpush1.msra.mxu0 0.0
        %584 = vmatprep.subr.mxu0 0.0
        %585 = vmatpush1.msra.mxu0 0.0
        %586 = vmatprep.subr.mxu0 0.0
        %587 = vmatpush1.msra.mxu0 0.0
        %588 = vmatprep.subr.mxu0 0.0
        %589 = vmatpush1.msra.mxu0 0.0
        %590 = vmatprep.subr.mxu0 0.0
        %591 = vmatpush1.msra.mxu0 0.0
        %592 = vmatprep.subr.mxu0 0.0
        %593 = vmatpush1.msra.mxu0 0.0
        %594 = vmatprep.subr.mxu0 0.0
        %595 = vmatpush1.msra.mxu0 0.0
        %596 = vmatprep.subr.mxu0 0.0
        %597 = vmatpush1.msra.mxu0 0.0
        %598 = vmatprep.subr.mxu0 0.0
        %599 = vmatpush1.msra.mxu0 0.0
        %600 = vmatprep.subr.mxu0 0.0
        %601 = vmatpush1.msra.mxu0 0.0
        %602 = vmatprep.subr.mxu0 0.0
        %603 = vmatpush1.msra.mxu0 0.0
        %604 = vmatprep.subr.mxu0 0.0
        %605 = vmatpush1.msra.mxu0 0.0
        %606 = vmatprep.subr.mxu0 0.0
        %607 = vmatpush1.msra.mxu0 0.0
        %608 = vmatprep.subr.mxu0 0.0
        %609 = vmatpush1.msra.mxu0 0.0
        %610 = vmatprep.subr.mxu0 0.0
        %611 = vmatpush1.msra.mxu0 0.0
        %612 = vmatprep.subr.mxu0 0.0
        %613 = vmatpush1.msra.mxu0 0.0
        %614 = vmatprep.subr.mxu0 0.0
        %615 = vmatpush1.msra.mxu0 0.0
        %616 = vmatprep.subr.mxu0 0.0
        %617 = vmatpush1.msra.mxu0 0.0
        %618 = vmatprep.subr.mxu0 0.0
        %619 = vmatpush1.msra.mxu0 0.0
        %620 = vmatprep.subr.mxu0 0.0
        %621 = vmatpush1.msra.mxu0 0.0
        %622 = vmatprep.subr.mxu0 0.0
        %623 = vmatpush1.msra.mxu0 0.0
        %624 = vmatprep.subr.mxu0 0.0
        %625 = vmatpush1.msra.mxu0 0.0
        %626 = vmatprep.subr.mxu0 0.0
        %627 = vmatpush1.msra.mxu0 0.0
        %628 = vmatprep.subr.mxu0 0.0
        %629 = vmatpush1.msra.mxu0 0.0
        %630 = vmatprep.subr.mxu0 0.0
        %631 = vmatpush1.msra.mxu0 0.0
        %632 = vmatprep.subr.mxu0 0.0
        %633 = vmatpush1.msra.mxu0 0.0
        %634 = vmatprep.subr.mxu0 0.0
        %635 = vmatpush1.msra.mxu0 0.0
        %636 = vmatprep.subr.mxu0 0.0
        %637 = vmatpush1.msra.mxu0 0.0
        %638 = vmatprep.subr.mxu0 0.0
        %639 = vmatpush1.msra.mxu0 0.0
        %640 = vmatprep.subr.mxu0 0.0
        %641 = vmatpush1.msra.mxu0 0.0
        %642 = vmatprep.mubr.f32.mxu0 0.0
        %643 = vmatmul.mubr.f32.gmra.mrb[0].mxu0 %v576
        %v644 = vpop.f32.mrb[0].mxu0
        %v645 = vadd.f32 0.0, %v644
        %v646 = vpop.f32.mrb[0].mxu0
        %v647 = vadd.f32 0.0, %v646
        %648 = vdwg.mxu0
        %v649 = vadd.f32 %v558, %v645
        %v650 = vadd.f32 %v560, %v647
        %651 = vrot.lane.b32.xlu0 %v385, 1
        %v652 = vpop.permute.xlu0 %651
        %653 = vrot.lane.b32.xlu0 %v386, 1
        %v654 = vpop.permute.xlu0 %653
        %vm655 = vcmp.lt.s32.totalorder %v224, 1
        %v656 = vsel %vm655, %v652, %v654
        %v657 = vsel %vm655, %v654, %v652
        %v658 = vsel %vm250, 1, 0
        %v659 = vsel %vm251, 1, 0
        %vm660 = vcmp.eq.s32.totalorder %v658, 1
        %vm661 = vcmp.eq.s32.totalorder %v659, 1
        %v662 = vsel %vm660, %v657, 0.0
        %v663 = vsel %vm661, %v656, 0.0
        %v665 = vsel %vm413, %v268, 0
        %667 = vmatprep.subr.mxu0 %v663
        %668 = vmatpush1.msra.mxu0 %v662
        %669 = vmatprep.subr.mxu0 0.0
        %670 = vmatpush1.msra.mxu0 0.0
        %671 = vmatprep.subr.mxu0 0.0
        %672 = vmatpush1.msra.mxu0 0.0
        %673 = vmatprep.subr.mxu0 0.0
        %674 = vmatpush1.msra.mxu0 0.0
        %675 = vmatprep.subr.mxu0 0.0
        %676 = vmatpush1.msra.mxu0 0.0
        %677 = vmatprep.subr.mxu0 0.0
        %678 = vmatpush1.msra.mxu0 0.0
        %679 = vmatprep.subr.mxu0 0.0
        %680 = vmatpush1.msra.mxu0 0.0
        %681 = vmatprep.subr.mxu0 0.0
        %682 = vmatpush1.msra.mxu0 0.0
        %683 = vmatprep.subr.mxu0 0.0
        %684 = vmatpush1.msra.mxu0 0.0
        %685 = vmatprep.subr.mxu0 0.0
        %686 = vmatpush1.msra.mxu0 0.0
        %687 = vmatprep.subr.mxu0 0.0
        %688 = vmatpush1.msra.mxu0 0.0
        %689 = vmatprep.subr.mxu0 0.0
        %690 = vmatpush1.msra.mxu0 0.0
        %691 = vmatprep.subr.mxu0 0.0
        %692 = vmatpush1.msra.mxu0 0.0
        %693 = vmatprep.subr.mxu0 0.0
        %694 = vmatpush1.msra.mxu0 0.0
        %695 = vmatprep.subr.mxu0 0.0
        %696 = vmatpush1.msra.mxu0 0.0
        %697 = vmatprep.subr.mxu0 0.0
        %698 = vmatpush1.msra.mxu0 0.0
        %699 = vmatprep.subr.mxu0 0.0
        %700 = vmatpush1.msra.mxu0 0.0
        %701 = vmatprep.subr.mxu0 0.0
        %702 = vmatpush1.msra.mxu0 0.0
        %703 = vmatprep.subr.mxu0 0.0
        %704 = vmatpush1.msra.mxu0 0.0
        %705 = vmatprep.subr.mxu0 0.0
        %706 = vmatpush1.msra.mxu0 0.0
        %707 = vmatprep.subr.mxu0 0.0
        %708 = vmatpush1.msra.mxu0 0.0
        %709 = vmatprep.subr.mxu0 0.0
        %710 = vmatpush1.msra.mxu0 0.0
        %711 = vmatprep.subr.mxu0 0.0
        %712 = vmatpush1.msra.mxu0 0.0
        %713 = vmatprep.subr.mxu0 0.0
        %714 = vmatpush1.msra.mxu0 0.0
        %715 = vmatprep.subr.mxu0 0.0
        %716 = vmatpush1.msra.mxu0 0.0
        %717 = vmatprep.subr.mxu0 0.0
        %718 = vmatpush1.msra.mxu0 0.0
        %719 = vmatprep.subr.mxu0 0.0
        %720 = vmatpush1.msra.mxu0 0.0
        %721 = vmatprep.subr.mxu0 0.0
        %722 = vmatpush1.msra.mxu0 0.0
        %723 = vmatprep.subr.mxu0 0.0
        %724 = vmatpush1.msra.mxu0 0.0
        %725 = vmatprep.subr.mxu0 0.0
        %726 = vmatpush1.msra.mxu0 0.0
        %727 = vmatprep.subr.mxu0 0.0
        %728 = vmatpush1.msra.mxu0 0.0
        %729 = vmatprep.subr.mxu0 0.0
        %730 = vmatpush1.msra.mxu0 0.0
        %731 = vmatprep.mubr.f32.mxu0 0.0
        %732 = vmatmul.mubr.f32.gmra.mrb[0].mxu0 %v665
        %v733 = vpop.f32.mrb[0].mxu0
        %v734 = vadd.f32 0.0, %v733
        %v735 = vpop.f32.mrb[0].mxu0
        %v736 = vadd.f32 0.0, %v735
        %737 = vdwg.mxu0
        %v738 = vadd.f32 %v649, %v734
        %v739 = vadd.f32 %v650, %v736
        %v741 = vsel %vm413, %v270, 0
        %743 = vmatprep.subr.mxu0 %v386
        %744 = vmatpush1.msra.mxu0 %v385
        %745 = vmatprep.subr.mxu0 0.0
        %746 = vmatpush1.msra.mxu0 0.0
        %747 = vmatprep.subr.mxu0 0.0
        %748 = vmatpush1.msra.mxu0 0.0
        %749 = vmatprep.subr.mxu0 0.0
        %750 = vmatpush1.msra.mxu0 0.0
        %751 = vmatprep.subr.mxu0 0.0
        %752 = vmatpush1.msra.mxu0 0.0
        %753 = vmatprep.subr.mxu0 0.0
        %754 = vmatpush1.msra.mxu0 0.0
        %755 = vmatprep.subr.mxu0 0.0
        %756 = vmatpush1.msra.mxu0 0.0
        %757 = vmatprep.subr.mxu0 0.0
        %758 = vmatpush1.msra.mxu0 0.0
        %759 = vmatprep.subr.mxu0 0.0
        %760 = vmatpush1.msra.mxu0 0.0
        %761 = vmatprep.subr.mxu0 0.0
        %762 = vmatpush1.msra.mxu0 0.0
        %763 = vmatprep.subr.mxu0 0.0
        %764 = vmatpush1.msra.mxu0 0.0
        %765 = vmatprep.subr.mxu0 0.0
        %766 = vmatpush1.msra.mxu0 0.0
        %767 = vmatprep.subr.mxu0 0.0
        %768 = vmatpush1.msra.mxu0 0.0
        %769 = vmatprep.subr.mxu0 0.0
        %770 = vmatpush1.msra.mxu0 0.0
        %771 = vmatprep.subr.mxu0 0.0
        %772 = vmatpush1.msra.mxu0 0.0
        %773 = vmatprep.subr.mxu0 0.0
        %774 = vmatpush1.msra.mxu0 0.0
        %775 = vmatprep.subr.mxu0 0.0
        %776 = vmatpush1.msra.mxu0 0.0
        %777 = vmatprep.subr.mxu0 0.0
        %778 = vmatpush1.msra.mxu0 0.0
        %779 = vmatprep.subr.mxu0 0.0
        %780 = vmatpush1.msra.mxu0 0.0
        %781 = vmatprep.subr.mxu0 0.0
        %782 = vmatpush1.msra.mxu0 0.0
        %783 = vmatprep.subr.mxu0 0.0
        %784 = vmatpush1.msra.mxu0 0.0
        %785 = vmatprep.subr.mxu0 0.0
        %786 = vmatpush1.msra.mxu0 0.0
        %787 = vmatprep.subr.mxu0 0.0
        %788 = vmatpush1.msra.mxu0 0.0
        %789 = vmatprep.subr.mxu0 0.0
        %790 = vmatpush1.msra.mxu0 0.0
        %791 = vmatprep.subr.mxu0 0.0
        %792 = vmatpush1.msra.mxu0 0.0
        %793 = vmatprep.subr.mxu0 0.0
        %794 = vmatpush1.msra.mxu0 0.0
        %795 = vmatprep.subr.mxu0 0.0
        %796 = vmatpush1.msra.mxu0 0.0
        %797 = vmatprep.subr.mxu0 0.0
        %798 = vmatpush1.msra.mxu0 0.0
        %799 = vmatprep.subr.mxu0 0.0
        %800 = vmatpush1.msra.mxu0 0.0
        %801 = vmatprep.subr.mxu0 0.0
        %802 = vmatpush1.msra.mxu0 0.0
        %803 = vmatprep.subr.mxu0 0.0
        %804 = vmatpush1.msra.mxu0 0.0
        %805 = vmatprep.subr.mxu0 0.0
        %806 = vmatpush1.msra.mxu0 0.0
        %807 = vmatprep.mubr.f32.mxu0 0.0
        %808 = vmatmul.mubr.f32.gmra.mrb[0].mxu0 %v741
        %v809 = vpop.f32.mrb[0].mxu0
        %v810 = vadd.f32 0.0, %v809
        %v811 = vpop.f32.mrb[0].mxu0
        %v812 = vadd.f32 0.0, %v811
        %813 = vdwg.mxu0
        %v814 = vadd.f32 %v738, %v810
        %v815 = vadd.f32 %v739, %v812
        %816 = vrot.lane.b32.xlu0 %v385, 127
        %v817 = vpop.permute.xlu0 %816
        %818 = vrot.lane.b32.xlu0 %v386, 127
        %v819 = vpop.permute.xlu0 %818
        %vm820 = vcmp.lt.s32.totalorder %v224, 127
        %v821 = vsel %vm820, %v817, %v819
        %v822 = vsel %vm820, %v819, %v817
        %v823 = vsel %vm252, 1, 0
        %v824 = vsel %vm253, 1, 0
        %vm825 = vcmp.eq.s32.totalorder %v823, 1
        %vm826 = vcmp.eq.s32.totalorder %v824, 1
        %v827 = vsel %vm825, %v821, 0.0
        %v828 = vsel %vm826, %v822, 0.0
        %v830 = vsel %vm413, %v272, 0
        %832 = vmatprep.subr.mxu0 %v828
        %833 = vmatpush1.msra.mxu0 %v827
        %834 = vmatprep.subr.mxu0 0.0
        %835 = vmatpush1.msra.mxu0 0.0
        %836 = vmatprep.subr.mxu0 0.0
        %837 = vmatpush1.msra.mxu0 0.0
        %838 = vmatprep.subr.mxu0 0.0
        %839 = vmatpush1.msra.mxu0 0.0
        %840 = vmatprep.subr.mxu0 0.0
        %841 = vmatpush1.msra.mxu0 0.0
        %842 = vmatprep.subr.mxu0 0.0
        %843 = vmatpush1.msra.mxu0 0.0
        %844 = vmatprep.subr.mxu0 0.0
        %845 = vmatpush1.msra.mxu0 0.0
        %846 = vmatprep.subr.mxu0 0.0
        %847 = vmatpush1.msra.mxu0 0.0
        %848 = vmatprep.subr.mxu0 0.0
        %849 = vmatpush1.msra.mxu0 0.0
        %850 = vmatprep.subr.mxu0 0.0
        %851 = vmatpush1.msra.mxu0 0.0
        %852 = vmatprep.subr.mxu0 0.0
        %853 = vmatpush1.msra.mxu0 0.0
        %854 = vmatprep.subr.mxu0 0.0
        %855 = vmatpush1.msra.mxu0 0.0
        %856 = vmatprep.subr.mxu0 0.0
        %857 = vmatpush1.msra.mxu0 0.0
        %858 = vmatprep.subr.mxu0 0.0
        %859 = vmatpush1.msra.mxu0 0.0
        %860 = vmatprep.subr.mxu0 0.0
        %861 = vmatpush1.msra.mxu0 0.0
        %862 = vmatprep.subr.mxu0 0.0
        %863 = vmatpush1.msra.mxu0 0.0
        %864 = vmatprep.subr.mxu0 0.0
        %865 = vmatpush1.msra.mxu0 0.0
        %866 = vmatprep.subr.mxu0 0.0
        %867 = vmatpush1.msra.mxu0 0.0
        %868 = vmatprep.subr.mxu0 0.0
        %869 = vmatpush1.msra.mxu0 0.0
        %870 = vmatprep.subr.mxu0 0.0
        %871 = vmatpush1.msra.mxu0 0.0
        %872 = vmatprep.subr.mxu0 0.0
        %873 = vmatpush1.msra.mxu0 0.0
        %874 = vmatprep.subr.mxu0 0.0
        %875 = vmatpush1.msra.mxu0 0.0
        %876 = vmatprep.subr.mxu0 0.0
        %877 = vmatpush1.msra.mxu0 0.0
        %878 = vmatprep.subr.mxu0 0.0
        %879 = vmatpush1.msra.mxu0 0.0
        %880 = vmatprep.subr.mxu0 0.0
        %881 = vmatpush1.msra.mxu0 0.0
        %882 = vmatprep.subr.mxu0 0.0
        %883 = vmatpush1.msra.mxu0 0.0
        %884 = vmatprep.subr.mxu0 0.0
        %885 = vmatpush1.msra.mxu0 0.0
        %886 = vmatprep.subr.mxu0 0.0
        %887 = vmatpush1.msra.mxu0 0.0
        %888 = vmatprep.subr.mxu0 0.0
        %889 = vmatpush1.msra.mxu0 0.0
        %890 = vmatprep.subr.mxu0 0.0
        %891 = vmatpush1.msra.mxu0 0.0
        %892 = vmatprep.subr.mxu0 0.0
        %893 = vmatpush1.msra.mxu0 0.0
        %894 = vmatprep.subr.mxu0 0.0
        %895 = vmatpush1.msra.mxu0 0.0
        %896 = vmatprep.mubr.f32.mxu0 0.0
        %897 = vmatmul.mubr.f32.gmra.mrb[0].mxu0 %v830
        %v898 = vpop.f32.mrb[0].mxu0
        %v899 = vadd.f32 0.0, %v898
        %v900 = vpop.f32.mrb[0].mxu0
        %v901 = vadd.f32 0.0, %v900
        %902 = vdwg.mxu0
        %v903 = vadd.f32 %v814, %v899
        %v904 = vadd.f32 %v815, %v901
        %905 = vrot.lane.b32.xlu0 %v385, 113
        %v906 = vpop.permute.xlu0 %905
        %907 = vrot.lane.b32.xlu0 %v386, 113
        %v908 = vpop.permute.xlu0 %907
        %vm909 = vcmp.lt.s32.totalorder %v224, 113
        %v910 = vsel %vm909, %v906, %v908
        %v911 = vsel %vm909, %v908, %v906
        %v912 = vsel %vm273, 1, 0
        %v913 = vsel %vm274, 1, 0
        %vm914 = vcmp.eq.s32.totalorder %v912, 1
        %vm915 = vcmp.eq.s32.totalorder %v913, 1
        %v916 = vsel %vm914, %v910, 0.0
        %v917 = vsel %vm915, %v911, 0.0
        %v919 = vsel %vm413, %v276, 0
        %921 = vmatprep.subr.mxu0 %v917
        %922 = vmatpush1.msra.mxu0 %v916
        %923 = vmatprep.subr.mxu0 0.0
        %924 = vmatpush1.msra.mxu0 0.0
        %925 = vmatprep.subr.mxu0 0.0
        %926 = vmatpush1.msra.mxu0 0.0
        %927 = vmatprep.subr.mxu0 0.0
        %928 = vmatpush1.msra.mxu0 0.0
        %929 = vmatprep.subr.mxu0 0.0
        %930 = vmatpush1.msra.mxu0 0.0
        %931 = vmatprep.subr.mxu0 0.0
        %932 = vmatpush1.msra.mxu0 0.0
        %933 = vmatprep.subr.mxu0 0.0
        %934 = vmatpush1.msra.mxu0 0.0
        %935 = vmatprep.subr.mxu0 0.0
        %936 = vmatpush1.msra.mxu0 0.0
        %937 = vmatprep.subr.mxu0 0.0
        %938 = vmatpush1.msra.mxu0 0.0
        %939 = vmatprep.subr.mxu0 0.0
        %940 = vmatpush1.msra.mxu0 0.0
        %941 = vmatprep.subr.mxu0 0.0
        %942 = vmatpush1.msra.mxu0 0.0
        %943 = vmatprep.subr.mxu0 0.0
        %944 = vmatpush1.msra.mxu0 0.0
        %945 = vmatprep.subr.mxu0 0.0
        %946 = vmatpush1.msra.mxu0 0.0
        %947 = vmatprep.subr.mxu0 0.0
        %948 = vmatpush1.msra.mxu0 0.0
        %949 = vmatprep.subr.mxu0 0.0
        %950 = vmatpush1.msra.mxu0 0.0
        %951 = vmatprep.subr.mxu0 0.0
        %952 = vmatpush1.msra.mxu0 0.0
        %953 = vmatprep.subr.mxu0 0.0
        %954 = vmatpush1.msra.mxu0 0.0
        %955 = vmatprep.subr.mxu0 0.0
        %956 = vmatpush1.msra.mxu0 0.0
        %957 = vmatprep.subr.mxu0 0.0
        %958 = vmatpush1.msra.mxu0 0.0
        %959 = vmatprep.subr.mxu0 0.0
        %960 = vmatpush1.msra.mxu0 0.0
        %961 = vmatprep.subr.mxu0 0.0
        %962 = vmatpush1.msra.mxu0 0.0
        %963 = vmatprep.subr.mxu0 0.0
        %964 = vmatpush1.msra.mxu0 0.0
        %965 = vmatprep.subr.mxu0 0.0
        %966 = vmatpush1.msra.mxu0 0.0
        %967 = vmatprep.subr.mxu0 0.0
        %968 = vmatpush1.msra.mxu0 0.0
        %969 = vmatprep.subr.mxu0 0.0
        %970 = vmatpush1.msra.mxu0 0.0
        %971 = vmatprep.subr.mxu0 0.0
        %972 = vmatpush1.msra.mxu0 0.0
        %973 = vmatprep.subr.mxu0 0.0
        %974 = vmatpush1.msra.mxu0 0.0
        %975 = vmatprep.subr.mxu0 0.0
        %976 = vmatpush1.msra.mxu0 0.0
        %977 = vmatprep.subr.mxu0 0.0
        %978 = vmatpush1.msra.mxu0 0.0
        %979 = vmatprep.subr.mxu0 0.0
        %980 = vmatpush1.msra.mxu0 0.0
        %981 = vmatprep.subr.mxu0 0.0
        %982 = vmatpush1.msra.mxu0 0.0
        %983 = vmatprep.subr.mxu0 0.0
        %984 = vmatpush1.msra.mxu0 0.0
        %985 = vmatprep.mubr.f32.mxu0 0.0
        %986 = vmatmul.mubr.f32.gmra.mrb[0].mxu0 %v919
        %v987 = vpop.f32.mrb[0].mxu0
        %v988 = vadd.f32 0.0, %v987
        %v989 = vpop.f32.mrb[0].mxu0
        %v990 = vadd.f32 0.0, %v989
        %991 = vdwg.mxu0
        %v992 = vadd.f32 %v903, %v988
        %v993 = vadd.f32 %v904, %v990
        %994 = vrot.lane.b32.xlu0 %v385, 112
        %v995 = vpop.permute.xlu0 %994
        %996 = vrot.lane.b32.xlu0 %v386, 112
        %v997 = vpop.permute.xlu0 %996
        %vm998 = vcmp.lt.s32.totalorder %v224, 112
        %v999 = vsel %vm998, %v995, %v997
        %v1000 = vsel %vm998, %v997, %v995
        %v1001 = vsel %vm256, 1, 0
        %v1002 = vsel %vm257, 1, 0
        %vm1003 = vcmp.eq.s32.totalorder %v1001, 1
        %vm1004 = vcmp.eq.s32.totalorder %v1002, 1
        %v1005 = vsel %vm1003, %v999, 0.0
        %v1006 = vsel %vm1004, %v1000, 0.0
        %v1008 = vsel %vm413, %v278, 0
        %1010 = vmatprep.subr.mxu0 %v1006
        %1011 = vmatpush1.msra.mxu0 %v1005
        %1012 = vmatprep.subr.mxu0 0.0
        %1013 = vmatpush1.msra.mxu0 0.0
        %1014 = vmatprep.subr.mxu0 0.0
        %1015 = vmatpush1.msra.mxu0 0.0
        %1016 = vmatprep.subr.mxu0 0.0
        %1017 = vmatpush1.msra.mxu0 0.0
        %1018 = vmatprep.subr.mxu0 0.0
        %1019 = vmatpush1.msra.mxu0 0.0
        %1020 = vmatprep.subr.mxu0 0.0
        %1021 = vmatpush1.msra.mxu0 0.0
        %1022 = vmatprep.subr.mxu0 0.0
        %1023 = vmatpush1.msra.mxu0 0.0
        %1024 = vmatprep.subr.mxu0 0.0
        %1025 = vmatpush1.msra.mxu0 0.0
        %1026 = vmatprep.subr.mxu0 0.0
        %1027 = vmatpush1.msra.mxu0 0.0
        %1028 = vmatprep.subr.mxu0 0.0
        %1029 = vmatpush1.msra.mxu0 0.0
        %1030 = vmatprep.subr.mxu0 0.0
        %1031 = vmatpush1.msra.mxu0 0.0
        %1032 = vmatprep.subr.mxu0 0.0
        %1033 = vmatpush1.msra.mxu0 0.0
        %1034 = vmatprep.subr.mxu0 0.0
        %1035 = vmatpush1.msra.mxu0 0.0
        %1036 = vmatprep.subr.mxu0 0.0
        %1037 = vmatpush1.msra.mxu0 0.0
        %1038 = vmatprep.subr.mxu0 0.0
        %1039 = vmatpush1.msra.mxu0 0.0
        %1040 = vmatprep.subr.mxu0 0.0
        %1041 = vmatpush1.msra.mxu0 0.0
        %1042 = vmatprep.subr.mxu0 0.0
        %1043 = vmatpush1.msra.mxu0 0.0
        %1044 = vmatprep.subr.mxu0 0.0
        %1045 = vmatpush1.msra.mxu0 0.0
        %1046 = vmatprep.subr.mxu0 0.0
        %1047 = vmatpush1.msra.mxu0 0.0
        %1048 = vmatprep.subr.mxu0 0.0
        %1049 = vmatpush1.msra.mxu0 0.0
        %1050 = vmatprep.subr.mxu0 0.0
        %1051 = vmatpush1.msra.mxu0 0.0
        %1052 = vmatprep.subr.mxu0 0.0
        %1053 = vmatpush1.msra.mxu0 0.0
        %1054 = vmatprep.subr.mxu0 0.0
        %1055 = vmatpush1.msra.mxu0 0.0
        %1056 = vmatprep.subr.mxu0 0.0
        %1057 = vmatpush1.msra.mxu0 0.0
        %1058 = vmatprep.subr.mxu0 0.0
        %1059 = vmatpush1.msra.mxu0 0.0
        %1060 = vmatprep.subr.mxu0 0.0
        %1061 = vmatpush1.msra.mxu0 0.0
        %1062 = vmatprep.subr.mxu0 0.0
        %1063 = vmatpush1.msra.mxu0 0.0
        %1064 = vmatprep.subr.mxu0 0.0
        %1065 = vmatpush1.msra.mxu0 0.0
        %1066 = vmatprep.subr.mxu0 0.0
        %1067 = vmatpush1.msra.mxu0 0.0
        %1068 = vmatprep.subr.mxu0 0.0
        %1069 = vmatpush1.msra.mxu0 0.0
        %1070 = vmatprep.subr.mxu0 0.0
        %1071 = vmatpush1.msra.mxu0 0.0
        %1072 = vmatprep.subr.mxu0 0.0
        %1073 = vmatpush1.msra.mxu0 0.0
        %1074 = vmatprep.mubr.f32.mxu0 0.0
        %1075 = vmatmul.mubr.f32.gmra.mrb[0].mxu0 %v1008
        %v1076 = vpop.f32.mrb[0].mxu0
        %v1077 = vadd.f32 0.0, %v1076
        %v1078 = vpop.f32.mrb[0].mxu0
        %v1079 = vadd.f32 0.0, %v1078
        %1080 = vdwg.mxu0
        %v1081 = vadd.f32 %v992, %v1077
        %v1082 = vadd.f32 %v993, %v1079
        %1083 = vrot.lane.b32.xlu0 %v385, 111
        %v1084 = vpop.permute.xlu0 %1083
        %1085 = vrot.lane.b32.xlu0 %v386, 111
        %v1086 = vpop.permute.xlu0 %1085
        %vm1087 = vcmp.lt.s32.totalorder %v224, 111
        %v1088 = vsel %vm1087, %v1084, %v1086
        %v1089 = vsel %vm1087, %v1086, %v1084
        %v1090 = vsel %vm279, 1, 0
        %v1091 = vsel %vm280, 1, 0
        %vm1092 = vcmp.eq.s32.totalorder %v1090, 1
        %vm1093 = vcmp.eq.s32.totalorder %v1091, 1
        %v1094 = vsel %vm1092, %v1088, 0.0
        %v1095 = vsel %vm1093, %v1089, 0.0
        %v1097 = vsel %vm413, %v282, 0
        %1099 = vmatprep.subr.mxu0 %v1095
        %1100 = vmatpush1.msra.mxu0 %v1094
        %1101 = vmatprep.subr.mxu0 0.0
        %1102 = vmatpush1.msra.mxu0 0.0
        %1103 = vmatprep.subr.mxu0 0.0
        %1104 = vmatpush1.msra.mxu0 0.0
        %1105 = vmatprep.subr.mxu0 0.0
        %1106 = vmatpush1.msra.mxu0 0.0
        %1107 = vmatprep.subr.mxu0 0.0
        %1108 = vmatpush1.msra.mxu0 0.0
        %1109 = vmatprep.subr.mxu0 0.0
        %1110 = vmatpush1.msra.mxu0 0.0
        %1111 = vmatprep.subr.mxu0 0.0
        %1112 = vmatpush1.msra.mxu0 0.0
        %1113 = vmatprep.subr.mxu0 0.0
        %1114 = vmatpush1.msra.mxu0 0.0
        %1115 = vmatprep.subr.mxu0 0.0
        %1116 = vmatpush1.msra.mxu0 0.0
        %1117 = vmatprep.subr.mxu0 0.0
        %1118 = vmatpush1.msra.mxu0 0.0
        %1119 = vmatprep.subr.mxu0 0.0
        %1120 = vmatpush1.msra.mxu0 0.0
        %1121 = vmatprep.subr.mxu0 0.0
        %1122 = vmatpush1.msra.mxu0 0.0
        %1123 = vmatprep.subr.mxu0 0.0
        %1124 = vmatpush1.msra.mxu0 0.0
        %1125 = vmatprep.subr.mxu0 0.0
        %1126 = vmatpush1.msra.mxu0 0.0
        %1127 = vmatprep.subr.mxu0 0.0
        %1128 = vmatpush1.msra.mxu0 0.0
        %1129 = vmatprep.subr.mxu0 0.0
        %1130 = vmatpush1.msra.mxu0 0.0
        %1131 = vmatprep.subr.mxu0 0.0
        %1132 = vmatpush1.msra.mxu0 0.0
        %1133 = vmatprep.subr.mxu0 0.0
        %1134 = vmatpush1.msra.mxu0 0.0
        %1135 = vmatprep.subr.mxu0 0.0
        %1136 = vmatpush1.msra.mxu0 0.0
        %1137 = vmatprep.subr.mxu0 0.0
        %1138 = vmatpush1.msra.mxu0 0.0
        %1139 = vmatprep.subr.mxu0 0.0
        %1140 = vmatpush1.msra.mxu0 0.0
        %1141 = vmatprep.subr.mxu0 0.0
        %1142 = vmatpush1.msra.mxu0 0.0
        %1143 = vmatprep.subr.mxu0 0.0
        %1144 = vmatpush1.msra.mxu0 0.0
        %1145 = vmatprep.subr.mxu0 0.0
        %1146 = vmatpush1.msra.mxu0 0.0
        %1147 = vmatprep.subr.mxu0 0.0
        %1148 = vmatpush1.msra.mxu0 0.0
        %1149 = vmatprep.subr.mxu0 0.0
        %1150 = vmatpush1.msra.mxu0 0.0
        %1151 = vmatprep.subr.mxu0 0.0
        %1152 = vmatpush1.msra.mxu0 0.0
        %1153 = vmatprep.subr.mxu0 0.0
        %1154 = vmatpush1.msra.mxu0 0.0
        %1155 = vmatprep.subr.mxu0 0.0
        %1156 = vmatpush1.msra.mxu0 0.0
        %1157 = vmatprep.subr.mxu0 0.0
        %1158 = vmatpush1.msra.mxu0 0.0
        %1159 = vmatprep.subr.mxu0 0.0
        %1160 = vmatpush1.msra.mxu0 0.0
        %1161 = vmatprep.subr.mxu0 0.0
        %1162 = vmatpush1.msra.mxu0 0.0
        %1163 = vmatprep.mubr.f32.mxu0 0.0
        %1164 = vmatmul.mubr.f32.gmra.mrb[0].mxu0 %v1097
        %v1165 = vpop.f32.mrb[0].mxu0
        %v1166 = vadd.f32 0.0, %v1165
        %v1167 = vpop.f32.mrb[0].mxu0
        %v1168 = vadd.f32 0.0, %v1167
        %1169 = vdwg.mxu0
        %v1170 = vadd.f32 %v1081, %v1166
        %v1171 = vadd.f32 %v1082, %v1168
        %v1172 = vadd.f32 %v1170, %v1171
        %1173 = vadd.xlane.f32.xlu0 %v1172
        %v1174 = vpop.xlane.xlu0 %1173
        %v1175 = vmul.f32 %v1174, 0.00390625
        %v1176 = vsub.f32 %v1170, %v1175
        %v1177 = vsub.f32 %v1171, %v1175
        %v1178 = vmul.f32 %v1176, %v1176
        %v1179 = vmul.f32 %v1177, %v1177
        %v1180 = vadd.f32 %v1178, %v1179
        %1181 = vadd.xlane.f32.xlu0 %v1180
        %v1182 = vpop.xlane.xlu0 %1181
        %v1183 = vmul.f32 %v1182, 0.00390625
        %v1184 = vadd.f32 %v1183, 1e-05
        %v1185 = vrsqrt.pop %v1184
        %v1186 = vmul.f32 %v1176, %v1185
        %v1187 = vmul.f32 %v1177, %v1185
        %v1188 = vmax.f32 %v1186, 0.0
        %v1189 = vmax.f32 %v1187, 0.0
        %v1191 = vsel %vm413, %v284, 0
        %1193 = vmatprep.subr.mxu0 %v1189
        %1194 = vmatpush1.msra.mxu0 %v1188
        %1195 = vmatprep.subr.mxu0 0.0
        %1196 = vmatpush1.msra.mxu0 0.0
        %1197 = vmatprep.subr.mxu0 0.0
        %1198 = vmatpush1.msra.mxu0 0.0
        %1199 = vmatprep.subr.mxu0 0.0
        %1200 = vmatpush1.msra.mxu0 0.0
        %1201 = vmatprep.subr.mxu0 0.0
        %1202 = vmatpush1.msra.mxu0 0.0
        %1203 = vmatprep.subr.mxu0 0.0
        %1204 = vmatpush1.msra.mxu0 0.0
        %1205 = vmatprep.subr.mxu0 0.0
        %1206 = vmatpush1.msra.mxu0 0.0
        %1207 = vmatprep.subr.mxu0 0.0
        %1208 = vmatpush1.msra.mxu0 0.0
        %1209 = vmatprep.subr.mxu0 0.0
        %1210 = vmatpush1.msra.mxu0 0.0
        %1211 = vmatprep.subr.mxu0 0.0
        %1212 = vmatpush1.msra.mxu0 0.0
        %1213 = vmatprep.subr.mxu0 0.0
        %1214 = vmatpush1.msra.mxu0 0.0
        %1215 = vmatprep.subr.mxu0 0.0
        %1216 = vmatpush1.msra.mxu0 0.0
        %1217 = vmatprep.subr.mxu0 0.0
        %1218 = vmatpush1.msra.mxu0 0.0
        %1219 = vmatprep.subr.mxu0 0.0
        %1220 = vmatpush1.msra.mxu0 0.0
        %1221 = vmatprep.subr.mxu0 0.0
        %1222 = vmatpush1.msra.mxu0 0.0
        %1223 = vmatprep.subr.mxu0 0.0
        %1224 = vmatpush1.msra.mxu0 0.0
        %1225 = vmatprep.subr.mxu0 0.0
        %1226 = vmatpush1.msra.mxu0 0.0
        %1227 = vmatprep.subr.mxu0 0.0
        %1228 = vmatpush1.msra.mxu0 0.0
        %1229 = vmatprep.subr.mxu0 0.0
        %1230 = vmatpush1.msra.mxu0 0.0
        %1231 = vmatprep.subr.mxu0 0.0
        %1232 = vmatpush1.msra.mxu0 0.0
        %1233 = vmatprep.subr.mxu0 0.0
        %1234 = vmatpush1.msra.mxu0 0.0
        %1235 = vmatprep.subr.mxu0 0.0
        %1236 = vmatpush1.msra.mxu0 0.0
        %1237 = vmatprep.subr.mxu0 0.0
        %1238 = vmatpush1.msra.mxu0 0.0
        %1239 = vmatprep.subr.mxu0 0.0
        %1240 = vmatpush1.msra.mxu0 0.0
        %1241 = vmatprep.subr.mxu0 0.0
        %1242 = vmatpush1.msra.mxu0 0.0
        %1243 = vmatprep.subr.mxu0 0.0
        %1244 = vmatpush1.msra.mxu0 0.0
        %1245 = vmatprep.subr.mxu0 0.0
        %1246 = vmatpush1.msra.mxu0 0.0
        %1247 = vmatprep.subr.mxu0 0.0
        %1248 = vmatpush1.msra.mxu0 0.0
        %1249 = vmatprep.subr.mxu0 0.0
        %1250 = vmatpush1.msra.mxu0 0.0
        %1251 = vmatprep.subr.mxu0 0.0
        %1252 = vmatpush1.msra.mxu0 0.0
        %1253 = vmatprep.subr.mxu0 0.0
        %1254 = vmatpush1.msra.mxu0 0.0
        %1255 = vmatprep.subr.mxu0 0.0
        %1256 = vmatpush1.msra.mxu0 0.0
        %1257 = vmatprep.mubr.f32.mxu0 0.0
        %1258 = vmatmul.mubr.f32.gmra.mrb[0].mxu0 %v1191
        %v1259 = vpop.f32.mrb[0].mxu0
        %v1260 = vadd.f32 0.0, %v1259
        %v1261 = vpop.f32.mrb[0].mxu0
        %v1262 = vadd.f32 0.0, %v1261
        %1263 = vdwg.mxu0
        %v1264 = vadd.f32 %v1260, %v1262
        %1265 = vadd.xlane.f32.xlu0 %v1264
        %v1266 = vpop.xlane.xlu0 %1265
        %v1267 = vmul.f32 %v1266, 0.00390625
        %v1268 = vsub.f32 %v1260, %v1267
        %v1269 = vsub.f32 %v1262, %v1267
        %v1270 = vmul.f32 %v1268, %v1268
        %v1271 = vmul.f32 %v1269, %v1269
        %v1272 = vadd.f32 %v1270, %v1271
        %1273 = vadd.xlane.f32.xlu0 %v1272
        %v1274 = vpop.xlane.xlu0 %1273
        %v1275 = vmul.f32 %v1274, 0.00390625
        %v1276 = vadd.f32 %v1275, 1e-05
        %v1277 = vrsqrt.pop %v1276
        %v1278 = vmul.f32 %v1268, %v1277
        %v1279 = vmul.f32 %v1269, %v1277
        %v1280 = vmax.f32 %v1278, 0.0
        %v1281 = vmax.f32 %v1279, 0.0
        %v1283 = vsel %vm289, %v285, 0
        %1285 = vmatprep.subr.mxu0 %v296
        %1286 = vmatpush1.msra.mxu0 %v294
        %1287 = vmatprep.subr.mxu0 0.0
        %1288 = vmatpush1.msra.mxu0 0.0
        %1289 = vmatprep.subr.mxu0 0.0
        %1290 = vmatpush1.msra.mxu0 0.0
        %1291 = vmatprep.subr.mxu0 0.0
        %1292 = vmatpush1.msra.mxu0 0.0
        %1293 = vmatprep.subr.mxu0 0.0
        %1294 = vmatpush1.msra.mxu0 0.0
        %1295 = vmatprep.subr.mxu0 0.0
        %1296 = vmatpush1.msra.mxu0 0.0
        %1297 = vmatprep.subr.mxu0 0.0
        %1298 = vmatpush1.msra.mxu0 0.0
        %1299 = vmatprep.subr.mxu0 0.0
        %1300 = vmatpush1.msra.mxu0 0.0
        %1301 = vmatprep.subr.mxu0 0.0
        %1302 = vmatpush1.msra.mxu0 0.0
        %1303 = vmatprep.subr.mxu0 0.0
        %1304 = vmatpush1.msra.mxu0 0.0
        %1305 = vmatprep.subr.mxu0 0.0
        %1306 = vmatpush1.msra.mxu0 0.0
        %1307 = vmatprep.subr.mxu0 0.0
        %1308 = vmatpush1.msra.mxu0 0.0
        %1309 = vmatprep.subr.mxu0 0.0
        %1310 = vmatpush1.msra.mxu0 0.0
        %1311 = vmatprep.subr.mxu0 0.0
        %1312 = vmatpush1.msra.mxu0 0.0
        %1313 = vmatprep.subr.mxu0 0.0
        %1314 = vmatpush1.msra.mxu0 0.0
        %1315 = vmatprep.subr.mxu0 0.0
        %1316 = vmatpush1.msra.mxu0 0.0
        %1317 = vmatprep.subr.mxu0 0.0
        %1318 = vmatpush1.msra.mxu0 0.0
        %1319 = vmatprep.subr.mxu0 0.0
        %1320 = vmatpush1.msra.mxu0 0.0
        %1321 = vmatprep.subr.mxu0 0.0
        %1322 = vmatpush1.msra.mxu0 0.0
        %1323 = vmatprep.subr.mxu0 0.0
        %1324 = vmatpush1.msra.mxu0 0.0
        %1325 = vmatprep.subr.mxu0 0.0
        %1326 = vmatpush1.msra.mxu0 0.0
        %1327 = vmatprep.subr.mxu0 0.0
        %1328 = vmatpush1.msra.mxu0 0.0
        %1329 = vmatprep.subr.mxu0 0.0
        %1330 = vmatpush1.msra.mxu0 0.0
        %1331 = vmatprep.subr.mxu0 0.0
        %1332 = vmatpush1.msra.mxu0 0.0
        %1333 = vmatprep.subr.mxu0 0.0
        %1334 = vmatpush1.msra.mxu0 0.0
        %1335 = vmatprep.subr.mxu0 0.0
        %1336 = vmatpush1.msra.mxu0 0.0
        %1337 = vmatprep.subr.mxu0 0.0
        %1338 = vmatpush1.msra.mxu0 0.0
        %1339 = vmatprep.subr.mxu0 0.0
        %1340 = vmatpush1.msra.mxu0 0.0
        %1341 = vmatprep.subr.mxu0 0.0
        %1342 = vmatpush1.msra.mxu0 0.0
        %1343 = vmatprep.subr.mxu0 0.0
        %1344 = vmatpush1.msra.mxu0 0.0
        %1345 = vmatprep.subr.mxu0 0.0
        %1346 = vmatpush1.msra.mxu0 0.0
        %1347 = vmatprep.subr.mxu0 0.0
        %1348 = vmatpush1.msra.mxu0 0.0
        %1349 = vmatprep.mubr.f32.mxu0 0.0
        %1350 = vmatmul.mubr.f32.gmra.mrb[0].mxu0 %v1283
        %v1351 = vpop.f32.mrb[0].mxu0
        %v1352 = vadd.f32 0.0, %v1351
        %v1353 = vpop.f32.mrb[0].mxu0
        %v1354 = vadd.f32 0.0, %v1353
        %1355 = vdwg.mxu0
        %v1356 = vadd.f32 %v1352, %v1354
        %1357 = vadd.xlane.f32.xlu0 %v1356
        %v1358 = vpop.xlane.xlu0 %1357
        %v1359 = vmul.f32 %v1358, 0.00390625
        %v1360 = vsub.f32 %v1352, %v1359
        %v1361 = vsub.f32 %v1354, %v1359
        %v1362 = vmul.f32 %v1360, %v1360
        %v1363 = vmul.f32 %v1361, %v1361
        %v1364 = vadd.f32 %v1362, %v1363
        %1365 = vadd.xlane.f32.xlu0 %v1364
        %v1366 = vpop.xlane.xlu0 %1365
        %v1367 = vmul.f32 %v1366, 0.00390625
        %v1368 = vadd.f32 %v1367, 1e-05
        %v1369 = vrsqrt.pop %v1368
        %v1370 = vmul.f32 %v1360, %v1369
        %v1371 = vmul.f32 %v1361, %v1369
        %v1372 = vadd.f32 %v1280, %v1370
        %v1373 = vadd.f32 %v1281, %v1371
        %1374 = vst [vmem:[%s217] sm:$0xff] %v1372
        %1375 = vst [vmem:[%s217 + $0x8] sm:$0xff] %v1373
        %s1376 = sand.u32 %s137, 1
        %s1377 = scalar_lea.sflag [#allocation3], %s1376
        %s1378 = sand.u32 %s137, 1
        %s1379 = smul.addr %s1378, 16
        %s1380 = scalar_lea.vmem [#allocation2], %s1379
        // Predicated region
        $region41: #{tpu_custom_call.1} parent=39 // pred_check
          %p1381 = pneg %p147
        $region42: #{tpu_custom_call.1} parent=39 // pred_check_branch
          %1383 = sbr.rel (%p1381) target = $region44
        $region43: #{tpu_custom_call.1} parent=39 // pred_region
          %s1385 = ssub.s32 256, 256
          %1386 = vsyncadd %s1377, %s1385
          %s1387 = smul.addr %s19, 2
          %s1388 = smul.addr %s1387, 128
          %s1389 = scalar_lea.hbm %s5, %s1388
          %s1391 = sshll.u32 %s1380, 4
          %s1392 = int_to_ptr.vmem [resolvable:$true] %s1391
          %1394 = dma.vmem_to_hbm [thread:$0]  %s1392, 256, %s1389, %s1377
        $region44: #{tpu_custom_call.1} parent=39 // pred_fallthru
          _
      $region40: #{tpu_custom_call.1} parent=5 // pred_fallthru
        _
      %p1395 = scmp.le.s32.totalorder 2, %s14
      // Predicated region
      $region45: #{tpu_custom_call.1} parent=5 // pred_check
        %p1396 = pneg %p1395
      $region46: #{tpu_custom_call.1} parent=5 // pred_check_branch
        %1398 = sbr.rel (%p1396) target = $region48
      $region47: #{tpu_custom_call.1} parent=5 // pred_region
        %s1399 = ssub.s32 %s14, 2
        // Predicated region
        $region49: #{tpu_custom_call.1} parent=47 // pred_check
          %p1400 = pneg %p153
        $region50: #{tpu_custom_call.1} parent=47 // pred_check_branch
          %1402 = sbr.rel (%p1400) target = $region52
        $region51: #{tpu_custom_call.1} parent=47 // pred_region
          %s1403 = sand.u32 %s138, 1
          %s1404 = scalar_lea.sflag [#allocation3], %s1403
          %s1405 = sand.u32 %s138, 1
          %s1406 = smul.addr %s1405, 16
          %s1407 = scalar_lea.vmem [#allocation2], %s1406
          %1408 = dma.done %s1404, 256
        $region52: #{tpu_custom_call.1} parent=47 // pred_fallthru
          _
      $region48: #{tpu_custom_call.1} parent=5 // pred_fallthru
        _
    $region6: #{tpu_custom_call.1} parent=1 // loop_footer
      %s18 = sadd.s32 1, %s14
    $region7: #{tpu_custom_call.1} parent=1 // loop_footer_branch
      %13 = sbr.rel target = $region3
    $region8: #{tpu_custom_call.1} parent=1 // loop_exit
      _
    %1409 = vsyncpa [#allocation3], 1
    %s1410 = scalar_lea.sflag [#allocation3], 1
    %1411 = vsyncpa %s1410, 1

</llo_original>
